<compile_context>
chip_gen: v7x
topology: tpu7x:2x2x1
jax: 0.10.0
libtpu: 0.0.40
codegen_flags: <defaults>
</compile_context>

<pallas_src>
import functools

import jax
import jax.numpy as jnp
from jax import lax
from jax.experimental import pallas as pl
from jax.experimental.pallas import tpu as pltpu


def _round_up(x, m):
    return (x + m - 1) // m * m


def _sigmoid(x):
    # sigmoid(x) = 0.5*(tanh(x/2)+1): exact, and lowers to the EUP tanh path.
    return 0.5 * jnp.tanh(0.5 * x) + 0.5


def _tpu_vmem_capacity():
    try:
        return int(pltpu.get_tpu_info().vmem_capacity_bytes)
    except Exception:
        return 64 * 1024 * 1024      # conservative (v7x per-core physical)


def _vmem_limit_bytes(live_block_bytes):
    # Explicit scoped-VMEM budget: 2x (double buffering) the live block bytes
    # plus slack, clamped to [32 MiB, ~90% of physical VMEM].
    hi = int(_tpu_vmem_capacity() * 0.9)
    want = 2 * int(live_block_bytes) + (4 << 20)
    return int(max(32 << 20, min(want, hi)))


# --------------------------- kernel A: attn + GRU ---------------------------
def attn_gru_kernel(tok_ref, emb_ref, h_ref, enc_ref, enct_ref,
                    ue_ref, qh_ref, c_ref,
                    wih_ref, bih_ref, whh_ref, bhh_ref,
                    hnew_ref, attn_ref, xo_ref, *, seq_len):
    del tok_ref                      # only used by the embedding-gather index_map
    f32 = jnp.float32
    bf16 = jnp.bfloat16
    hp = h_ref.shape[1]              # padded hidden size (multiple of 128)

    h = h_ref[...]                   # (1, Hp)  f32
    emb = emb_ref[0]                 # (1, Hp)  f32  (gathered embedding row)

    # Bahdanau 'concat' attention with v folded into the score weights.
    # Exact because the reference scoring is linear (no tanh):
    #   score_i = v.(W [h;enc_i] + b) = enc_i.u_e + h.q_h + c
    scores = jnp.dot(ue_ref[...], enct_ref[...],
                     preferred_element_type=f32)                       # (1, Lp)
    scores = scores + jnp.sum(h * qh_ref[...], axis=1, keepdims=True) + c_ref[...]
    l_iota = lax.broadcasted_iota(jnp.int32, scores.shape, 1)
    scores = jnp.where(l_iota < seq_len, scores, -1e30)                # mask pad
    scores = scores - jnp.max(scores, axis=1, keepdims=True)
    es = jnp.exp(scores)
    attn_w = es / jnp.sum(es, axis=1, keepdims=True)                   # exact softmax
    attn_ref[...] = attn_w

    # context = attn_weights @ encoder_outputs  (natural MXU orientation)
    ctx = jnp.dot(attn_w.astype(bf16), enc_ref[...],
                  preferred_element_type=f32)                          # (1, Hp)

    # GRU cell on x = [emb ; ctx]; gate matmuls fused: gi = x@Wih^T, gh = h@Whh^T
    x = jnp.concatenate([emb, ctx], axis=1).astype(bf16)               # (1, 2Hp)
    gi = jnp.dot(x, wih_ref[...], preferred_element_type=f32) + bih_ref[...]
    gh = jnp.dot(h.astype(bf16), whh_ref[...],
                 preferred_element_type=f32) + bhh_ref[...]            # (1, 3Hp)
    r = _sigmoid(gi[:, :hp] + gh[:, :hp])
    z = _sigmoid(gi[:, hp:2 * hp] + gh[:, hp:2 * hp])
    n = jnp.tanh(gi[:, 2 * hp:] + r * gh[:, 2 * hp:])
    h_new = (1.0 - z) * n + z * h                                      # (1, Hp)
    hnew_ref[...] = h_new

    # fused output-projection input, consumed by the vocab-projection kernel
    xo_ref[...] = jnp.concatenate([h_new, ctx], axis=1).astype(bf16)   # (1, 2Hp)


# ----------------------- kernel B: vocab projection -------------------------
def vocab_proj_kernel(xo_ref, wq_ref, scale_ref, bout_ref, logits_ref):
    # Weight-only dequant: int8 (or bf16) tile -> bf16 for the MXU.
    # int8 values in [-127,127] are exact in bf16, so the two-step cast is exact.
    w = wq_ref[...].astype(jnp.float32).astype(jnp.bfloat16)
    acc = jnp.dot(xo_ref[...], w, preferred_element_type=jnp.float32)  # (1, TILE_V)
    logits_ref[...] = acc * scale_ref[...] + bout_ref[...]


# ------------------------------ parameters ----------------------------------
def init_params(key, hidden_size, output_size):
    H, V = hidden_size, output_size
    ks = jax.random.split(key, 10)
    s = 0.1
    nrm = lambda k, shp: (jax.random.normal(k, shp, jnp.float32) * s)
    return {
        "embedding": nrm(ks[0], (V, H)),
        "attn_W":    nrm(ks[1], (H, 2 * H)),   # nn.Linear(2H -> H) weight
        "attn_b":    nrm(ks[2], (H,)),
        "attn_v":    nrm(ks[3], (1, H)),
        # GRU (intended input size 2H; see TODO at top)
        "gru_W_ih":  nrm(ks[4], (3 * H, 2 * H)),
        "gru_W_hh":  nrm(ks[5], (3 * H, H)),
        "gru_b_ih":  nrm(ks[6], (3 * H,)),
        "gru_b_hh":  nrm(ks[7], (3 * H,)),
        # out Linear (intended input size 2H)
        "out_W":     nrm(ks[8], (V, 2 * H)),
        "out_b":     nrm(ks[9], (V,)),
    }


def prepack_params(params, quantize_out="int8"):
    """One-time weight packing: fold v, fuse GRU gates, fuse/pad the output
    projection, and quantize the dominant HBM stream (out_W) to int8 with
    per-column scales (weight-only).  quantize_out=None keeps bf16 weights."""
    f32 = jnp.float32
    bf16 = jnp.bfloat16
    H = params["attn_v"].shape[1]
    V = params["out_W"].shape[0]
    H_pad = _round_up(H, 128)

    # Generation-aware vocab tile: larger tiles amortize the ~0.35 us/step grid
    # overhead on chips with VMEM headroom (v5e/v6e); 2048 on v7x (64 MiB).
    tile_cap = 4096 if _tpu_vmem_capacity() >= (100 << 20) else 2048
    V_pad128 = _round_up(V, 128)
    TILE_V = min(V_pad128, tile_cap)
    V_pad = _round_up(V, TILE_V)

    padH = lambda vec: jnp.pad(vec.astype(f32), (0, H_pad - H))
    padHH = lambda M: jnp.pad(M.astype(f32), ((0, H_pad - H), (0, H_pad - H)))

    # --- attention: fold v into the score weights (exact: no tanh in reference)
    W, b, v = params["attn_W"], params["attn_b"], params["attn_v"]
    vW = v.astype(f32) @ W.astype(f32)                                  # (1, 2H)
    q_h = jnp.pad(vW[:, :H], ((0, 0), (0, H_pad - H)))                  # (1, Hp) f32
    u_e = jnp.pad(vW[:, H:], ((0, 0), (0, H_pad - H))).astype(bf16)     # (1, Hp) bf16
    c = v.astype(f32) @ b.astype(f32)[:, None]                          # (1, 1)

    # --- GRU: gates fused, pre-transposed, padded.  x = [emb;ctx], gates [r|z|n]
    Wih, Whh = params["gru_W_ih"], params["gru_W_hh"]
    bih, bhh = params["gru_b_ih"], params["gru_b_hh"]
    gi_blocks, gh_blocks = [], []
    for g in range(3):                                 # gate order r, z, n
        Wg = Wih[g * H:(g + 1) * H]                    # (H, 2H)
        gi_blocks.append((padHH(Wg[:, :H].T), padHH(Wg[:, H:].T)))
        gh_blocks.append(padHH(Whh[g * H:(g + 1) * H].T))
    wih_t = jnp.block([[gi_blocks[0][0], gi_blocks[1][0], gi_blocks[2][0]],
                       [gi_blocks[0][1], gi_blocks[1][1], gi_blocks[2][1]]])  # (2Hp,3Hp)
    whh_t = jnp.concatenate(gh_blocks, axis=1)                                # (Hp, 3Hp)
    bih_p = jnp.concatenate([padH(bih[g * H:(g + 1) * H]) for g in range(3)])[None, :]
    bhh_p = jnp.concatenate([padH(bhh[g * H:(g + 1) * H]) for g in range(3)])[None, :]

    # --- output projection: fused [h_new;ctx] @ Wout^T, padded to (2Hp, Vp)
    Wo, bo = params["out_W"], params["out_b"]
    wout_t = jnp.concatenate(
        [jnp.pad(Wo[:, :H].T.astype(f32), ((0, H_pad - H), (0, V_pad - V))),
         jnp.pad(Wo[:, H:].T.astype(f32), ((0, H_pad - H), (0, V_pad - V)))],
        axis=0)                                                               # (2Hp, Vp)
    bout_p = jnp.pad(bo.astype(f32), (0, V_pad - V))[None, :]                 # (1, Vp)

    if quantize_out == "int8":
        # per-column symmetric int8 (weight-only; dequant to bf16 in-kernel)
        amax = jnp.max(jnp.abs(wout_t), axis=0, keepdims=True)
        scale = jnp.where(amax > 0, amax / 127.0, 1.0)                        # (1, Vp)
        wout_q = jnp.clip(jnp.round(wout_t / scale), -127, 127).astype(jnp.int8)
    else:
        scale = jnp.ones((1, V_pad), f32)
        wout_q = wout_t.astype(bf16)

    # embedding table reshaped (V, 1, Hp) so the in-kernel row gather uses a
    # (1, 1, Hp) block whose trailing dims equal the full array dims.
    emb_table = jnp.pad(params["embedding"].astype(f32),
                        ((0, 0), (0, H_pad - H))).reshape(V, 1, H_pad)

    return {
        "emb_table": emb_table,
        "u_e": u_e, "q_h": q_h, "c": c,
        "wih_t": wih_t.astype(bf16), "bih": bih_p,
        "whh_t": whh_t.astype(bf16), "bhh": bhh_p,
        "wout_q": wout_q, "out_scale": scale, "bout": bout_p,
        "H": H, "V": V, "H_pad": H_pad, "V_pad": V_pad, "TILE_V": TILE_V,
    }


# ------------------------------- forward ------------------------------------
def bahdanau_decoder_forward(packed, word_input, last_hidden, encoder_outputs):
    """word_input: (1,) int32; last_hidden: (n_layers, 1, H);
    encoder_outputs: (L, 1, H).  Returns (log_probs (1,V), hidden (1,1,H),
    attn_weights (1,1,L)), matching the reference forward (dropout = eval)."""
    H, V = packed["H"], packed["V"]
    H_pad, V_pad, TILE_V = packed["H_pad"], packed["V_pad"], packed["TILE_V"]
    L = encoder_outputs.shape[0]
    L_pad = _round_up(L, 16)         # bf16 sublane multiple; no more 128 padding
    n_tiles = V_pad // TILE_V
    f32, bf16 = jnp.float32, jnp.bfloat16

    # Per-step activation glue (weights are packed once, outside).
    # TODO(synk): when decoding a full sentence, enc/enc_t padding+cast can be
    # hoisted out of the per-token step (encoder outputs are loop-invariant).
    h_prev = jnp.pad(last_hidden[-1].astype(f32), ((0, 0), (0, H_pad - H)))   # (1, Hp)
    enc = jnp.pad(encoder_outputs[:, 0, :],
                  ((0, L_pad - L), (0, H_pad - H))).astype(bf16)              # (Lp, Hp)
    enc_t = enc.T                                                             # (Hp, Lp)
    tok = word_input.astype(jnp.int32)                                        # (1,)

    # ---------------- kernel A: attention + context + GRU cell --------------
    a_bytes = (H_pad * 4 + H_pad * 4                       # emb row + h_prev
               + 2 * L_pad * H_pad * 2                     # enc + enc^T (bf16)
               + H_pad * 2 + H_pad * 4 + 4                 # u_e, q_h, c
               + (2 * H_pad) * (3 * H_pad) * 2 + 3 * H_pad * 4
               + H_pad * (3 * H_pad) * 2 + 3 * H_pad * 4
               + H_pad * 4 + L_pad * 4 + 2 * H_pad * 2)    # outputs
    const = lambda i, tok: (0, 0)
    kern_a = functools.partial(attn_gru_kernel, seq_len=L)
    h_new, attn_w, xo = pl.pallas_call(
        kern_a,
        grid_spec=pltpu.PrefetchScalarGridSpec(
            num_scalar_prefetch=1,        # word_input -> SMEM, drives emb gather
            grid=(1,),
            in_specs=[
                pl.BlockSpec((1, 1, H_pad), lambda i, tok: (tok[0], 0, 0)),  # emb row
                pl.BlockSpec((1, H_pad), const),             # h_prev
                pl.BlockSpec((L_pad, H_pad), const),         # enc   (bf16)
                pl.BlockSpec((H_pad, L_pad), const),         # enc^T (bf16)
                pl.BlockSpec((1, H_pad), const),             # u_e (v folded)
                pl.BlockSpec((1, H_pad), const),             # q_h (v folded)
                pl.BlockSpec((1, 1), const),                 # c  (v . attn bias)
                pl.BlockSpec((2 * H_pad, 3 * H_pad), const),  # Wih^T (fused gates)
                pl.BlockSpec((1, 3 * H_pad), const),          # b_ih
                pl.BlockSpec((H_pad, 3 * H_pad), const),      # Whh^T (fused gates)
                pl.BlockSpec((1, 3 * H_pad), const),          # b_hh
            ],
            out_specs=(
                pl.BlockSpec((1, H_pad), const),              # new hidden
                pl.BlockSpec((1, L_pad), const),              # attention weights
                pl.BlockSpec((1, 2 * H_pad), const),          # xo = [h_new ; ctx]
            ),
        ),
        out_shape=(jax.ShapeDtypeStruct((1, H_pad), f32),
                   jax.ShapeDtypeStruct((1, L_pad), f32),
                   jax.ShapeDtypeStruct((1, 2 * H_pad), bf16)),
        compiler_params=pltpu.CompilerParams(
            dimension_semantics=("arbitrary",),
            vmem_limit_bytes=_vmem_limit_bytes(a_bytes)),
    )(tok, packed["emb_table"], h_prev, enc, enc_t, packed["u_e"],
      packed["q_h"], packed["c"], packed["wih_t"], packed["bih"],
      packed["whh_t"], packed["bhh"])

    # --------------- kernel B: vocab-tiled output projection ----------------
    bw = packed["wout_q"].dtype.itemsize
    b_bytes = (2 * H_pad * 2                       # xo (bf16, grid-invariant, tiny)
               + 2 * H_pad * TILE_V * bw           # weight tile (dominant stream)
               + 2 * TILE_V * 4                    # scale + bias tiles
               + TILE_V * 4)                       # logits tile
    logits = pl.pallas_call(
        vocab_proj_kernel,
        grid_spec=pltpu.PrefetchScalarGridSpec(
            num_scalar_prefetch=0,
            grid=(n_tiles,),
            in_specs=[
                pl.BlockSpec((1, 2 * H_pad), lambda j: (0, 0)),         # xo
                pl.BlockSpec((2 * H_pad, TILE_V), lambda j: (0, j)),    # W tile
                pl.BlockSpec((1, TILE_V), lambda j: (0, j)),            # scale tile
                pl.BlockSpec((1, TILE_V), lambda j: (0, j)),            # bias tile
            ],
            out_specs=pl.BlockSpec((1, TILE_V), lambda j: (0, j)),      # raw logits
        ),
        out_shape=jax.ShapeDtypeStruct((1, V_pad), f32),
        compiler_params=pltpu.CompilerParams(
            # independent tiles: lets both v7x TensorCores stream the weights
            dimension_semantics=("parallel",),
            vmem_limit_bytes=_vmem_limit_bytes(b_bytes)),
    )(xo, packed["wout_q"], packed["out_scale"], packed["bout"])

    # Deferred log-softmax normalization in the wrapper (exact; avoids the
    # serial logsumexp carry that would force an "arbitrary" grid).
    logits_v = logits[:, :V]
    m = jnp.max(logits_v, axis=1, keepdims=True)
    lse = m + jnp.log(jnp.sum(jnp.exp(logits_v - m), axis=1, keepdims=True))
    logp = logits_v - lse                                   # (1, V)

    hidden_out = h_new[:, :H][None, :, :]                   # (n_layers=1, B=1, H)
    attn_out = attn_w[:, :L][:, None, :]                    # (B=1, 1, L)
    return logp, hidden_out, attn_out


if __name__ == "__main__":
    H, V, L = 32, 16, 8        # hidden_size, output_size (vocab), encoder seq len
    key = jax.random.PRNGKey(0)
    kp, kh, ke = jax.random.split(key, 3)

    params = init_params(kp, H, V)
    packed = prepack_params(params)            # one-time fold/fuse/pad/quantize

    word_input = jnp.array([3], dtype=jnp.int32)                       # single token
    last_hidden = jax.random.normal(kh, (1, 1, H), jnp.float32)        # (n_layers, B, H)
    encoder_outputs = jax.random.normal(ke, (L, 1, H), jnp.float32)    # (L, B, H)

    step = jax.jit(functools.partial(bahdanau_decoder_forward, packed))
    logp, hidden, attn_w = step(word_input, last_hidden, encoder_outputs)
    jax.block_until_ready((logp, hidden, attn_w))

    assert logp.shape == (1, V)
    assert hidden.shape == (1, 1, H)
    assert attn_w.shape == (1, 1, L)
    # cheap self-checks: both softmaxes normalize
    assert abs(float(jnp.exp(logp).sum()) - 1.0) < 1e-3
    assert abs(float(attn_w.sum()) - 1.0) < 1e-3
    print("KERNEL_OK")
</pallas_src>

<mosaic_0001>
module attributes {stable_mosaic.version = 11 : i64} {
  func.func @attn_gru_kernel(%arg0: i32, %arg1: memref<1xi32, #tpu.memory_space<smem>>, %arg2: memref<1x1x128xf32, #tpu.memory_space<vmem>>, %arg3: memref<1x128xf32, #tpu.memory_space<vmem>>, %arg4: memref<16x128xbf16, #tpu.memory_space<vmem>>, %arg5: memref<128x16xbf16, #tpu.memory_space<vmem>>, %arg6: memref<1x128xbf16, #tpu.memory_space<vmem>>, %arg7: memref<1x128xf32, #tpu.memory_space<vmem>>, %arg8: memref<1x1xf32, #tpu.memory_space<vmem>>, %arg9: memref<256x384xbf16, #tpu.memory_space<vmem>>, %arg10: memref<1x384xf32, #tpu.memory_space<vmem>>, %arg11: memref<128x384xbf16, #tpu.memory_space<vmem>>, %arg12: memref<1x384xf32, #tpu.memory_space<vmem>>, %arg13: memref<1x128xf32, #tpu.memory_space<vmem>>, %arg14: memref<1x16xf32, #tpu.memory_space<vmem>>, %arg15: memref<1x256xbf16, #tpu.memory_space<vmem>>) attributes {dimension_semantics = [#tpu.dimension_semantics<arbitrary>], iteration_bounds = array<i64: 1>, scalar_prefetch = 1 : i64, scratch_operands = 0 : i64, tpu.core_type = #tpu.core_type<tc>, window_params = [{transform_indices = @transform_0, window_bounds = array<i64: 1, 1, 128>}, {pipeline_mode = #tpu.pipeline_mode<synchronous>, transform_indices = @transform_1, window_bounds = array<i64: 1, 128>}, {pipeline_mode = #tpu.pipeline_mode<synchronous>, transform_indices = @transform_2, window_bounds = array<i64: 16, 128>}, {pipeline_mode = #tpu.pipeline_mode<synchronous>, transform_indices = @transform_3, window_bounds = array<i64: 128, 16>}, {pipeline_mode = #tpu.pipeline_mode<synchronous>, transform_indices = @transform_4, window_bounds = array<i64: 1, 128>}, {pipeline_mode = #tpu.pipeline_mode<synchronous>, transform_indices = @transform_5, window_bounds = array<i64: 1, 128>}, {pipeline_mode = #tpu.pipeline_mode<synchronous>, transform_indices = @transform_6, window_bounds = array<i64: 1, 1>}, {pipeline_mode = #tpu.pipeline_mode<synchronous>, transform_indices = @transform_7, window_bounds = array<i64: 256, 384>}, {pipeline_mode = #tpu.pipeline_mode<synchronous>, transform_indices = @transform_8, window_bounds = array<i64: 1, 384>}, {pipeline_mode = #tpu.pipeline_mode<synchronous>, transform_indices = @transform_9, window_bounds = array<i64: 128, 384>}, {pipeline_mode = #tpu.pipeline_mode<synchronous>, transform_indices = @transform_10, window_bounds = array<i64: 1, 384>}, {pipeline_mode = #tpu.pipeline_mode<synchronous>, transform_indices = @transform_11, window_bounds = array<i64: 1, 128>}, {pipeline_mode = #tpu.pipeline_mode<synchronous>, transform_indices = @transform_12, window_bounds = array<i64: 1, 16>}, {pipeline_mode = #tpu.pipeline_mode<synchronous>, transform_indices = @transform_13, window_bounds = array<i64: 1, 256>}]} {
    %c0 = arith.constant 0 : index
    %c0_0 = arith.constant 0 : index
    %0 = vector.load %arg3[%c0, %c0_0] : memref<1x128xf32, #tpu.memory_space<vmem>>, vector<1x128xf32>
    %c0_1 = arith.constant 0 : index
    %c0_2 = arith.constant 0 : index
    %c0_3 = arith.constant 0 : index
    %1 = vector.load %arg2[%c0_1, %c0_2, %c0_3] : memref<1x1x128xf32, #tpu.memory_space<vmem>>, vector<1x1x128xf32>
    %2 = vector.shape_cast %1 : vector<1x1x128xf32> to vector<1x128xf32>
    %c0_4 = arith.constant 0 : index
    %c0_5 = arith.constant 0 : index
    %3 = vector.load %arg6[%c0_4, %c0_5] : memref<1x128xbf16, #tpu.memory_space<vmem>>, vector<1x128xbf16>
    %c0_6 = arith.constant 0 : index
    %c0_7 = arith.constant 0 : index
    %4 = vector.load %arg5[%c0_6, %c0_7] : memref<128x16xbf16, #tpu.memory_space<vmem>>, vector<128x16xbf16>
    %cst = arith.constant dense<0.000000e+00> : vector<1x16xf32>
    %5 = tpu.matmul %3, %4, %cst {dimension_numbers = #tpu.dot_dimension_numbers<[1], [0], [0], [1], [0, 0, 1, 1], [], []>} : vector<1x128xbf16>, vector<128x16xbf16>, vector<1x16xf32> -> vector<1x16xf32>
    %c0_8 = arith.constant 0 : index
    %c0_9 = arith.constant 0 : index
    %6 = vector.load %arg7[%c0_8, %c0_9] : memref<1x128xf32, #tpu.memory_space<vmem>>, vector<1x128xf32>
    %7 = arith.mulf %0, %6 : vector<1x128xf32>
    %cst_10 = arith.constant dense<0.000000e+00> : vector<1xf32>
    %8 = vector.multi_reduction <add>, %7, %cst_10 [1] : vector<1x128xf32> to vector<1xf32>
    %9 = vector.shape_cast %8 : vector<1xf32> to vector<1x1xf32>
    %10 = vector.broadcast %9 : vector<1x1xf32> to vector<1x16xf32>
    %11 = arith.addf %5, %10 : vector<1x16xf32>
    %c0_11 = arith.constant 0 : index
    %c0_12 = arith.constant 0 : index
    %12 = vector.load %arg8[%c0_11, %c0_12] : memref<1x1xf32, #tpu.memory_space<vmem>>, vector<1x1xf32>
    %13 = vector.broadcast %12 : vector<1x1xf32> to vector<1x16xf32>
    %14 = arith.addf %11, %13 : vector<1x16xf32>
    %15 = tpu.iota {dimensions = array<i32: 1>} : vector<1x16xi32>
    %c8_i32 = arith.constant 8 : i32
    %16 = vector.broadcast %c8_i32 : i32 to vector<1x16xi32>
    %17 = arith.cmpi slt, %15, %16 : vector<1x16xi32>
    %cst_13 = arith.constant -1.000000e+30 : f32
    %18 = vector.broadcast %cst_13 : f32 to vector<1x16xf32>
    %19 = arith.select %17, %14, %18 : vector<1x16xi1>, vector<1x16xf32>
    %cst_14 = arith.constant dense<0xFF800000> : vector<1xf32>
    %20 = vector.multi_reduction <maximumf>, %19, %cst_14 [1] : vector<1x16xf32> to vector<1xf32>
    %21 = vector.shape_cast %20 : vector<1xf32> to vector<1x1xf32>
    %22 = vector.broadcast %21 : vector<1x1xf32> to vector<1x16xf32>
    %23 = arith.subf %19, %22 : vector<1x16xf32>
    %24 = math.exp %23 : vector<1x16xf32>
    %cst_15 = arith.constant dense<0.000000e+00> : vector<1xf32>
    %25 = vector.multi_reduction <add>, %24, %cst_15 [1] : vector<1x16xf32> to vector<1xf32>
    %26 = vector.shape_cast %25 : vector<1xf32> to vector<1x1xf32>
    %27 = vector.broadcast %26 : vector<1x1xf32> to vector<1x16xf32>
    %28 = arith.divf %24, %27 : vector<1x16xf32>
    %c0_16 = arith.constant 0 : index
    %c0_17 = arith.constant 0 : index
    %29 = vector.load %arg14[%c0_16, %c0_17] : memref<1x16xf32, #tpu.memory_space<vmem>>, vector<1x16xf32>
    tpu.vector_store %arg14[%c0_16, %c0_17], %28 {strides = array<i32>} : memref<1x16xf32, #tpu.memory_space<vmem>>, vector<1x16xf32>,
    %30 = arith.truncf %28 : vector<1x16xf32> to vector<1x16xbf16>
    %c0_18 = arith.constant 0 : index
    %c0_19 = arith.constant 0 : index
    %31 = vector.load %arg4[%c0_18, %c0_19] : memref<16x128xbf16, #tpu.memory_space<vmem>>, vector<16x128xbf16>
    %cst_20 = arith.constant dense<0.000000e+00> : vector<1x128xf32>
    %32 = tpu.matmul %30, %31, %cst_20 {dimension_numbers = #tpu.dot_dimension_numbers<[1], [0], [0], [1], [0, 0, 1, 1], [], []>} : vector<1x16xbf16>, vector<16x128xbf16>, vector<1x128xf32> -> vector<1x128xf32>
    %33 = tpu.concatenate %2, %32 in 1 : vector<1x128xf32>, vector<1x128xf32> -> vector<1x256xf32>
    %34 = arith.truncf %33 : vector<1x256xf32> to vector<1x256xbf16>
    %c0_21 = arith.constant 0 : index
    %c0_22 = arith.constant 0 : index
    %35 = vector.load %arg9[%c0_21, %c0_22] : memref<256x384xbf16, #tpu.memory_space<vmem>>, vector<256x384xbf16>
    %cst_23 = arith.constant dense<0.000000e+00> : vector<1x384xf32>
    %36 = tpu.matmul %34, %35, %cst_23 {dimension_numbers = #tpu.dot_dimension_numbers<[1], [0], [0], [1], [0, 0, 1, 1], [], []>} : vector<1x256xbf16>, vector<256x384xbf16>, vector<1x384xf32> -> vector<1x384xf32>
    %c0_24 = arith.constant 0 : index
    %c0_25 = arith.constant 0 : index
    %37 = vector.load %arg10[%c0_24, %c0_25] : memref<1x384xf32, #tpu.memory_space<vmem>>, vector<1x384xf32>
    %38 = arith.addf %36, %37 : vector<1x384xf32>
    %39 = arith.truncf %0 : vector<1x128xf32> to vector<1x128xbf16>
    %c0_26 = arith.constant 0 : index
    %c0_27 = arith.constant 0 : index
    %40 = vector.load %arg11[%c0_26, %c0_27] : memref<128x384xbf16, #tpu.memory_space<vmem>>, vector<128x384xbf16>
    %cst_28 = arith.constant dense<0.000000e+00> : vector<1x384xf32>
    %41 = tpu.matmul %39, %40, %cst_28 {dimension_numbers = #tpu.dot_dimension_numbers<[1], [0], [0], [1], [0, 0, 1, 1], [], []>} : vector<1x128xbf16>, vector<128x384xbf16>, vector<1x384xf32> -> vector<1x384xf32>
    %c0_29 = arith.constant 0 : index
    %c0_30 = arith.constant 0 : index
    %42 = vector.load %arg12[%c0_29, %c0_30] : memref<1x384xf32, #tpu.memory_space<vmem>>, vector<1x384xf32>
    %43 = arith.addf %41, %42 : vector<1x384xf32>
    %44 = vector.extract_strided_slice %38 {offsets = [0, 0], sizes = [1, 128], strides = [1, 1]} : vector<1x384xf32> to vector<1x128xf32>
    %45 = vector.extract_strided_slice %43 {offsets = [0, 0], sizes = [1, 128], strides = [1, 1]} : vector<1x384xf32> to vector<1x128xf32>
    %46 = arith.addf %44, %45 : vector<1x128xf32>
    %cst_31 = arith.constant 5.000000e-01 : f32
    %47 = vector.broadcast %cst_31 : f32 to vector<1x128xf32>
    %48 = arith.mulf %47, %46 : vector<1x128xf32>
    %49 = math.tanh %48 : vector<1x128xf32>
    %cst_32 = arith.constant 5.000000e-01 : f32
    %50 = vector.broadcast %cst_32 : f32 to vector<1x128xf32>
    %51 = arith.mulf %50, %49 : vector<1x128xf32>
    %cst_33 = arith.constant 5.000000e-01 : f32
    %52 = vector.broadcast %cst_33 : f32 to vector<1x128xf32>
    %53 = arith.addf %51, %52 : vector<1x128xf32>
    %54 = vector.extract_strided_slice %38 {offsets = [0, 128], sizes = [1, 128], strides = [1, 1]} : vector<1x384xf32> to vector<1x128xf32>
    %55 = vector.extract_strided_slice %43 {offsets = [0, 128], sizes = [1, 128], strides = [1, 1]} : vector<1x384xf32> to vector<1x128xf32>
    %56 = arith.addf %54, %55 : vector<1x128xf32>
    %cst_34 = arith.constant 5.000000e-01 : f32
    %57 = vector.broadcast %cst_34 : f32 to vector<1x128xf32>
    %58 = arith.mulf %57, %56 : vector<1x128xf32>
    %59 = math.tanh %58 : vector<1x128xf32>
    %cst_35 = arith.constant 5.000000e-01 : f32
    %60 = vector.broadcast %cst_35 : f32 to vector<1x128xf32>
    %61 = arith.mulf %60, %59 : vector<1x128xf32>
    %cst_36 = arith.constant 5.000000e-01 : f32
    %62 = vector.broadcast %cst_36 : f32 to vector<1x128xf32>
    %63 = arith.addf %61, %62 : vector<1x128xf32>
    %64 = vector.extract_strided_slice %38 {offsets = [0, 256], sizes = [1, 128], strides = [1, 1]} : vector<1x384xf32> to vector<1x128xf32>
    %65 = vector.extract_strided_slice %43 {offsets = [0, 256], sizes = [1, 128], strides = [1, 1]} : vector<1x384xf32> to vector<1x128xf32>
    %66 = arith.mulf %53, %65 : vector<1x128xf32>
    %67 = arith.addf %64, %66 : vector<1x128xf32>
    %68 = math.tanh %67 : vector<1x128xf32>
    %cst_37 = arith.constant 1.000000e+00 : f32
    %69 = vector.broadcast %cst_37 : f32 to vector<1x128xf32>
    %70 = arith.subf %69, %63 : vector<1x128xf32>
    %71 = arith.mulf %70, %68 : vector<1x128xf32>
    %72 = arith.mulf %63, %0 : vector<1x128xf32>
    %73 = arith.addf %71, %72 : vector<1x128xf32>
    %c0_38 = arith.constant 0 : index
    %c0_39 = arith.constant 0 : index
    %74 = vector.load %arg13[%c0_38, %c0_39] : memref<1x128xf32, #tpu.memory_space<vmem>>, vector<1x128xf32>
    tpu.vector_store %arg13[%c0_38, %c0_39], %73 {strides = array<i32>} : memref<1x128xf32, #tpu.memory_space<vmem>>, vector<1x128xf32>,
    %75 = tpu.concatenate %73, %32 in 1 : vector<1x128xf32>, vector<1x128xf32> -> vector<1x256xf32>
    %76 = arith.truncf %75 : vector<1x256xf32> to vector<1x256xbf16>
    %c0_40 = arith.constant 0 : index
    %c0_41 = arith.constant 0 : index
    %77 = vector.load %arg15[%c0_40, %c0_41] : memref<1x256xbf16, #tpu.memory_space<vmem>>, vector<1x256xbf16>
    tpu.vector_store %arg15[%c0_40, %c0_41], %76 {strides = array<i32>} : memref<1x256xbf16, #tpu.memory_space<vmem>>, vector<1x256xbf16>,
    return
  }
  func.func @transform_0(%arg0: i32, %arg1: memref<1xi32, #tpu.memory_space<smem>>) -> (i32, i32, i32) {
    %c0 = arith.constant 0 : index
    %0 = memref.load %arg1[%c0] : memref<1xi32, #tpu.memory_space<smem>>
    %c0_i32 = arith.constant 0 : i32
    %c0_i32_0 = arith.constant 0 : i32
    %c0_i32_1 = arith.constant 0 : i32
    return %0, %c0_i32, %c0_i32_0 : i32, i32, i32
  }
  func.func @transform_1(%arg0: i32, %arg1: memref<1xi32, #tpu.memory_space<smem>>) -> (i32, i32) {
    %c0_i32 = arith.constant 0 : i32
    %c0_i32_0 = arith.constant 0 : i32
    %c0_i32_1 = arith.constant 0 : i32
    return %c0_i32, %c0_i32_0 : i32, i32
  }
  func.func @transform_2(%arg0: i32, %arg1: memref<1xi32, #tpu.memory_space<smem>>) -> (i32, i32) {
    %c0_i32 = arith.constant 0 : i32
    %c0_i32_0 = arith.constant 0 : i32
    %c0_i32_1 = arith.constant 0 : i32
    return %c0_i32, %c0_i32_0 : i32, i32
  }
  func.func @transform_3(%arg0: i32, %arg1: memref<1xi32, #tpu.memory_space<smem>>) -> (i32, i32) {
    %c0_i32 = arith.constant 0 : i32
    %c0_i32_0 = arith.constant 0 : i32
    %c0_i32_1 = arith.constant 0 : i32
    return %c0_i32, %c0_i32_0 : i32, i32
  }
  func.func @transform_4(%arg0: i32, %arg1: memref<1xi32, #tpu.memory_space<smem>>) -> (i32, i32) {
    %c0_i32 = arith.constant 0 : i32
    %c0_i32_0 = arith.constant 0 : i32
    %c0_i32_1 = arith.constant 0 : i32
    return %c0_i32, %c0_i32_0 : i32, i32
  }
  func.func @transform_5(%arg0: i32, %arg1: memref<1xi32, #tpu.memory_space<smem>>) -> (i32, i32) {
    %c0_i32 = arith.constant 0 : i32
    %c0_i32_0 = arith.constant 0 : i32
    %c0_i32_1 = arith.constant 0 : i32
    return %c0_i32, %c0_i32_0 : i32, i32
  }
  func.func @transform_6(%arg0: i32, %arg1: memref<1xi32, #tpu.memory_space<smem>>) -> (i32, i32) {
    %c0_i32 = arith.constant 0 : i32
    %c0_i32_0 = arith.constant 0 : i32
    %c0_i32_1 = arith.constant 0 : i32
    return %c0_i32, %c0_i32_0 : i32, i32
  }
  func.func @transform_7(%arg0: i32, %arg1: memref<1xi32, #tpu.memory_space<smem>>) -> (i32, i32) {
    %c0_i32 = arith.constant 0 : i32
    %c0_i32_0 = arith.constant 0 : i32
    %c0_i32_1 = arith.constant 0 : i32
    return %c0_i32, %c0_i32_0 : i32, i32
  }
  func.func @transform_8(%arg0: i32, %arg1: memref<1xi32, #tpu.memory_space<smem>>) -> (i32, i32) {
    %c0_i32 = arith.constant 0 : i32
    %c0_i32_0 = arith.constant 0 : i32
    %c0_i32_1 = arith.constant 0 : i32
    return %c0_i32, %c0_i32_0 : i32, i32
  }
  func.func @transform_9(%arg0: i32, %arg1: memref<1xi32, #tpu.memory_space<smem>>) -> (i32, i32) {
    %c0_i32 = arith.constant 0 : i32
    %c0_i32_0 = arith.constant 0 : i32
    %c0_i32_1 = arith.constant 0 : i32
    return %c0_i32, %c0_i32_0 : i32, i32
  }
  func.func @transform_10(%arg0: i32, %arg1: memref<1xi32, #tpu.memory_space<smem>>) -> (i32, i32) {
    %c0_i32 = arith.constant 0 : i32
    %c0_i32_0 = arith.constant 0 : i32
    %c0_i32_1 = arith.constant 0 : i32
    return %c0_i32, %c0_i32_0 : i32, i32
  }
  func.func @transform_11(%arg0: i32, %arg1: memref<1xi32, #tpu.memory_space<smem>>) -> (i32, i32) {
    %c0_i32 = arith.constant 0 : i32
    %c0_i32_0 = arith.constant 0 : i32
    %c0_i32_1 = arith.constant 0 : i32
    return %c0_i32, %c0_i32_0 : i32, i32
  }
  func.func @transform_12(%arg0: i32, %arg1: memref<1xi32, #tpu.memory_space<smem>>) -> (i32, i32) {
    %c0_i32 = arith.constant 0 : i32
    %c0_i32_0 = arith.constant 0 : i32
    %c0_i32_1 = arith.constant 0 : i32
    return %c0_i32, %c0_i32_0 : i32, i32
  }
  func.func @transform_13(%arg0: i32, %arg1: memref<1xi32, #tpu.memory_space<smem>>) -> (i32, i32) {
    %c0_i32 = arith.constant 0 : i32
    %c0_i32_0 = arith.constant 0 : i32
    %c0_i32_1 = arith.constant 0 : i32
    return %c0_i32, %c0_i32_0 : i32, i32
  }
}

module attributes {stable_mosaic.version = 11 : i64} {
  func.func @vocab_proj_kernel(%arg0: i32, %arg1: memref<1x256xbf16, #tpu.memory_space<vmem>>, %arg2: memref<256x128xi8, #tpu.memory_space<vmem>>, %arg3: memref<1x128xf32, #tpu.memory_space<vmem>>, %arg4: memref<1x128xf32, #tpu.memory_space<vmem>>, %arg5: memref<1x128xf32, #tpu.memory_space<vmem>>) attributes {dimension_semantics = [#tpu.dimension_semantics<parallel>], iteration_bounds = array<i64: 1>, scalar_prefetch = 0 : i64, scratch_operands = 0 : i64, tpu.core_type = #tpu.core_type<tc>, window_params = [{pipeline_mode = #tpu.pipeline_mode<synchronous>, transform_indices = @transform_0, window_bounds = array<i64: 1, 256>}, {transform_indices = @transform_1, window_bounds = array<i64: 256, 128>}, {transform_indices = @transform_2, window_bounds = array<i64: 1, 128>}, {transform_indices = @transform_3, window_bounds = array<i64: 1, 128>}, {transform_indices = @transform_4, window_bounds = array<i64: 1, 128>}]} {
    %c0 = arith.constant 0 : index
    %c0_0 = arith.constant 0 : index
    %0 = vector.load %arg2[%c0, %c0_0] : memref<256x128xi8, #tpu.memory_space<vmem>>, vector<256x128xi8>
    %1 = arith.sitofp %0 : vector<256x128xi8> to vector<256x128xf32>
    %2 = arith.truncf %1 : vector<256x128xf32> to vector<256x128xbf16>
    %c0_1 = arith.constant 0 : index
    %c0_2 = arith.constant 0 : index
    %3 = vector.load %arg1[%c0_1, %c0_2] : memref<1x256xbf16, #tpu.memory_space<vmem>>, vector<1x256xbf16>
    %cst = arith.constant dense<0.000000e+00> : vector<1x128xf32>
    %4 = tpu.matmul %3, %2, %cst {dimension_numbers = #tpu.dot_dimension_numbers<[1], [0], [0], [1], [0, 0, 1, 1], [], []>} : vector<1x256xbf16>, vector<256x128xbf16>, vector<1x128xf32> -> vector<1x128xf32>
    %c0_3 = arith.constant 0 : index
    %c0_4 = arith.constant 0 : index
    %5 = vector.load %arg3[%c0_3, %c0_4] : memref<1x128xf32, #tpu.memory_space<vmem>>, vector<1x128xf32>
    %6 = arith.mulf %4, %5 : vector<1x128xf32>
    %c0_5 = arith.constant 0 : index
    %c0_6 = arith.constant 0 : index
    %7 = vector.load %arg4[%c0_5, %c0_6] : memref<1x128xf32, #tpu.memory_space<vmem>>, vector<1x128xf32>
    %8 = arith.addf %6, %7 : vector<1x128xf32>
    %c0_7 = arith.constant 0 : index
    %c0_8 = arith.constant 0 : index
    %9 = vector.load %arg5[%c0_7, %c0_8] : memref<1x128xf32, #tpu.memory_space<vmem>>, vector<1x128xf32>
    tpu.vector_store %arg5[%c0_7, %c0_8], %8 {strides = array<i32>} : memref<1x128xf32, #tpu.memory_space<vmem>>, vector<1x128xf32>,
    return
  }
  func.func @transform_0(%arg0: i32) -> (i32, i32) {
    %c0_i32 = arith.constant 0 : i32
    %c0_i32_0 = arith.constant 0 : i32
    %c0_i32_1 = arith.constant 0 : i32
    return %c0_i32, %c0_i32_0 : i32, i32
  }
  func.func @transform_1(%arg0: i32) -> (i32, i32) {
    %c0_i32 = arith.constant 0 : i32
    %c0_i32_0 = arith.constant 0 : i32
    return %c0_i32, %arg0 : i32, i32
  }
  func.func @transform_2(%arg0: i32) -> (i32, i32) {
    %c0_i32 = arith.constant 0 : i32
    %c0_i32_0 = arith.constant 0 : i32
    return %c0_i32, %arg0 : i32, i32
  }
  func.func @transform_3(%arg0: i32) -> (i32, i32) {
    %c0_i32 = arith.constant 0 : i32
    %c0_i32_0 = arith.constant 0 : i32
    return %c0_i32, %arg0 : i32, i32
  }
  func.func @transform_4(%arg0: i32) -> (i32, i32) {
    %c0_i32 = arith.constant 0 : i32
    %c0_i32_0 = arith.constant 0 : i32
    return %c0_i32, %arg0 : i32, i32
  }
}

</mosaic_0001>

<llo_original>
// kernel: bahdanau_decoder_forward.3
$region0: #{bahdanau_decoder_forward.3}
  #allocation0 [shape = 'u32[]', space=smem, size = 0x4, offset = 0x4, fixed_abs, tag = 'smem constant byte address 0x4 - core index']
  #allocation1 [shape = 'u32[144,128]{1,0:T(1,128)}', space=vmem, size = 0x12000, scoped, tag = 'internal scratch']
  %s0 = inlined_call_operand.vmem [shape: bf16[1,256], index: 0, kind: input, shape index: {}]
  %s1 = inlined_call_operand.vmem [shape: s8[256,128], index: 1, kind: input, shape index: {}]
  %s2 = inlined_call_operand.vmem [shape: f32[1,128], index: 2, kind: input, shape index: {}]
  %s3 = inlined_call_operand.vmem [shape: f32[1,128], index: 3, kind: input, shape index: {}]
  %s4 = inlined_call_operand.vmem [shape: f32[1,128], index: 4, kind: output, shape index: {}]
  %s5 = sld [smem:[#allocation0]]
  $region26: #{bahdanau_decoder_forward.3} parent=0
    _
  %s7 = ssub.s32 1, %s5
  %s8 = scalar_select 0, %s7, %s5
  // Predicated region
  $region2: #{bahdanau_decoder_forward.3} parent=0 // pred_check
    _
  $region3: #{bahdanau_decoder_forward.3} parent=0 // pred_check_branch
    %10 = sbr.rel (0) target = $region5
  $region4: #{bahdanau_decoder_forward.3} parent=0 // pred_region
    _
  $region5: #{bahdanau_decoder_forward.3} parent=0 // pred_fallthru
    _
  // Predicated region
  $region6: #{bahdanau_decoder_forward.3} parent=0 // pred_check
    _
  $region7: #{bahdanau_decoder_forward.3} parent=0 // pred_check_branch
    %12 = sbr.rel (0) target = $region9
  $region8: #{bahdanau_decoder_forward.3} parent=0 // pred_region
    _
  $region9: #{bahdanau_decoder_forward.3} parent=0 // pred_fallthru
    _
  // Predicated region
  $region10: #{bahdanau_decoder_forward.3} parent=0 // pred_check
    _
  $region11: #{bahdanau_decoder_forward.3} parent=0 // pred_check_branch
    %14 = sbr.rel (0) target = $region13
  $region12: #{bahdanau_decoder_forward.3} parent=0 // pred_region
    _
  $region13: #{bahdanau_decoder_forward.3} parent=0 // pred_fallthru
    _
  // Predicated region
  $region14: #{bahdanau_decoder_forward.3} parent=0 // pred_check
    _
  $region15: #{bahdanau_decoder_forward.3} parent=0 // pred_check_branch
    %16 = sbr.rel (0) target = $region17
  $region16: #{bahdanau_decoder_forward.3} parent=0 // pred_region
    _
  $region17: #{bahdanau_decoder_forward.3} parent=0 // pred_fallthru
    _
  %v18 = vld [vmem:[%s1] sm:$0xff]
  %v19 = vld [vmem:[%s1 + $0x8] sm:$0xff]
  %v20 = vld [vmem:[%s1 + $0x10] sm:$0xff]
  %v21 = vld [vmem:[%s1 + $0x18] sm:$0xff]
  %v22 = vld [vmem:[%s1 + $0x20] sm:$0xff]
  %v23 = vld [vmem:[%s1 + $0x28] sm:$0xff]
  %v24 = vld [vmem:[%s1 + $0x30] sm:$0xff]
  %v25 = vld [vmem:[%s1 + $0x38] sm:$0xff]
  %v26 = vunpack.c.l.s8.bf16 %v18
  %v27 = vunpack.c.h.s8.bf16 %v18
  %v28 = vunpack.c.l.s8.bf16 %v19
  %v29 = vunpack.c.h.s8.bf16 %v19
  %v30 = vunpack.c.l.s8.bf16 %v20
  %v31 = vunpack.c.h.s8.bf16 %v20
  %v32 = vunpack.c.l.s8.bf16 %v21
  %v33 = vunpack.c.h.s8.bf16 %v21
  %v34 = vunpack.c.l.s8.bf16 %v22
  %v35 = vunpack.c.h.s8.bf16 %v22
  %v36 = vunpack.c.l.s8.bf16 %v23
  %v37 = vunpack.c.h.s8.bf16 %v23
  %v38 = vunpack.c.l.s8.bf16 %v24
  %v39 = vunpack.c.h.s8.bf16 %v24
  %v40 = vunpack.c.l.s8.bf16 %v25
  %v41 = vunpack.c.h.s8.bf16 %v25
  %v42 = vld [vmem:[%s0] sm:$0x3]
  %v45 = vunpack.c.l.s4 1966171168
  %v46 = vunpack.c.0.s8 %v45
  %v47 = vlaneseq
  %v48 = vshrl.u32 %v47, 7
  %v49 = vsub.s32 %v46, %v48
  %v50 = vrot.slane %v42, %v49
  %v51 = vcombine.high %v50, %v50
  %v53 = vunpack.c.l.s4 1966171168
  %v54 = vunpack.c.0.s8 %v53
  %v55 = vlaneseq
  %v56 = vshrl.u32 %v55, 7
  %v57 = vsub.s32 %v54, %v56
  %v58 = vrot.slane %v50, %v57
  %v60 = vunpack.c.l.s4 1966171168
  %v61 = vunpack.c.0.s8 %v60
  %v62 = vlaneseq
  %v63 = vshrl.u32 %v62, 7
  %v64 = vsub.s32 %v61, %v63
  %v65 = vrot.slane %v51, %v64
  %68 = vmatprep.subr.bf16.mxu0 0
  %69 = vmatpush1.bf16.msra.mxu0 %v26
  %70 = vmatprep.subr.bf16.mxu0 0
  %71 = vmatpush1.bf16.msra.mxu0 %v27
  %72 = vmatprep.subr.bf16.mxu0 0
  %73 = vmatpush1.bf16.msra.mxu0 %v28
  %74 = vmatprep.subr.bf16.mxu0 0
  %75 = vmatpush1.bf16.msra.mxu0 %v29
  %76 = vmatprep.subr.bf16.mxu0 0
  %77 = vmatpush1.bf16.msra.mxu0 %v30
  %78 = vmatprep.subr.bf16.mxu0 0
  %79 = vmatpush1.bf16.msra.mxu0 %v31
  %80 = vmatprep.subr.bf16.mxu0 0
  %81 = vmatpush1.bf16.msra.mxu0 %v32
  %82 = vmatprep.subr.bf16.mxu0 0
  %83 = vmatpush1.bf16.msra.mxu0 %v33
  %84 = vmatprep.subr.bf16.mxu0 0
  %85 = vmatpush1.bf16.msra.mxu0 %v34
  %86 = vmatprep.subr.bf16.mxu0 0
  %87 = vmatpush1.bf16.msra.mxu0 %v35
  %88 = vmatprep.subr.bf16.mxu0 0
  %89 = vmatpush1.bf16.msra.mxu0 %v36
  %90 = vmatprep.subr.bf16.mxu0 0
  %91 = vmatpush1.bf16.msra.mxu0 %v37
  %92 = vmatprep.subr.bf16.mxu0 0
  %93 = vmatpush1.bf16.msra.mxu0 %v38
  %94 = vmatprep.subr.bf16.mxu0 0
  %95 = vmatpush1.bf16.msra.mxu0 %v39
  %96 = vmatprep.subr.bf16.mxu0 0
  %97 = vmatpush1.bf16.msra.mxu0 %v40
  %98 = vmatprep.subr.bf16.mxu0 0
  %99 = vmatpush1.bf16.msra.mxu0 %v41
  %100 = vmatprep.mubr.bf16.mxu0 %v65
  %101 = vmatmul.mubr.bf16.gmra.mrb[0].mxu0 %v58
  %v102 = vpop.f32.mrb[0].mxu0
  %v103 = vadd.f32 0.0, %v102
  %v104 = vpop.f32.mrb[0].mxu0
  %v105 = vpop.f32.mrb[0].mxu0
  %v106 = vpop.f32.mrb[0].mxu0
  %107 = vdwg.mxu0
  %v108 = vld [vmem:[%s2] sm:$0x1]
  %v109 = vmul.f32 %v103, %v108
  %v110 = vld [vmem:[%s3] sm:$0x1]
  %v111 = vadd.f32 %v109, %v110
  %112 = vst [vmem:[%s4] sm:$0x1] %v111
  // Predicated region
  $region18: #{bahdanau_decoder_forward.3} parent=0 // pred_check
    _
  $region19: #{bahdanau_decoder_forward.3} parent=0 // pred_check_branch
    %114 = sbr.rel (0) target = $region21
  $region20: #{bahdanau_decoder_forward.3} parent=0 // pred_region
    _
  $region21: #{bahdanau_decoder_forward.3} parent=0 // pred_fallthru
    _
  // Predicated region
  $region22: #{bahdanau_decoder_forward.3} parent=0 // pred_check
    _
  $region23: #{bahdanau_decoder_forward.3} parent=0 // pred_check_branch
    %116 = sbr.rel (0) target = $region25
  $region24: #{bahdanau_decoder_forward.3} parent=0 // pred_region
    _
  $region25: #{bahdanau_decoder_forward.3} parent=0 // pred_fallthru
    _

// kernel: bahdanau_decoder_forward.2
$region0: #{bahdanau_decoder_forward.2}
  #allocation0 [shape = 'u32[]', space=smem, size = 0x4, offset = 0x4, fixed_abs, tag = 'smem constant byte address 0x4 - core index']
  #allocation1 [shape = 'u32[144,128]{1,0:T(1,128)}', space=vmem, size = 0x12000, scoped, tag = 'internal scratch']
  #allocation2 [shape = 's32[1]{0}', space=sflag, size = 0x4, scoped, tag = 'scoped memory for bahdanau_decoder_forward.2']
  #allocation3 [shape = 's32[1]{0:T(128)S(6)}', space=smem, size = 0x200, scoped, tag = 'prefetched SMEM operand 0']
  #allocation4 [shape = 'f32[1,1]{1,0:T(1,128)S(1)}', space=vmem, size = 0x200, scoped, tag = 'scoped memory for bahdanau_decoder_forward.2']
  %s0 = inlined_call_operand.<no memory space> [shape: s32[1], index: 0, kind: input, shape index: {}]
  %s1 = inlined_call_operand.vmem [shape: f32[16,1,128], index: 1, kind: input, shape index: {}]
  %s2 = inlined_call_operand.vmem [shape: f32[1,128], index: 2, kind: input, shape index: {}]
  %s3 = inlined_call_operand.vmem [shape: bf16[16,128], index: 3, kind: input, shape index: {}]
  %s4 = inlined_call_operand.vmem [shape: bf16[128,16], index: 4, kind: input, shape index: {}]
  %s5 = inlined_call_operand.vmem [shape: bf16[1,128], index: 5, kind: input, shape index: {}]
  %s6 = inlined_call_operand.vmem [shape: f32[1,128], index: 6, kind: input, shape index: {}]
  %s7 = inlined_call_operand.<no memory space> [shape: f32[1,1], index: 7, kind: input, shape index: {}]
  %s8 = inlined_call_operand.vmem [shape: bf16[256,384], index: 8, kind: input, shape index: {}]
  %s9 = inlined_call_operand.vmem [shape: f32[1,384], index: 9, kind: input, shape index: {}]
  %s10 = inlined_call_operand.vmem [shape: bf16[128,384], index: 10, kind: input, shape index: {}]
  %s11 = inlined_call_operand.vmem [shape: f32[1,384], index: 11, kind: input, shape index: {}]
  %s12 = inlined_call_operand.vmem [shape: f32[1,128], index: 12, kind: output, shape index: {0}]
  %s13 = inlined_call_operand.vmem [shape: f32[1,16], index: 13, kind: output, shape index: {1}]
  %s14 = inlined_call_operand.vmem [shape: bf16[1,256], index: 14, kind: output, shape index: {2}]
  %15 = xla_tuple %s12, %s13, %s14
  %s16 = sld [smem:[#allocation0]]
  $region70: #{bahdanau_decoder_forward.2} parent=0
    _
  %s18 = ssub.s32 1, %s16
  %s19 = scalar_select 0, %s18, %s16
  %20 = sst [smem:[#allocation3]] %s0
  %v21 = vstv %s7
  %22 = vst [vmem:[#allocation4] sm:$0x1] %v21
  // Predicated region
  $region2: #{bahdanau_decoder_forward.2} parent=0 // pred_check
    _
  $region3: #{bahdanau_decoder_forward.2} parent=0 // pred_check_branch
    %24 = sbr.rel (0) target = $region5
  $region4: #{bahdanau_decoder_forward.2} parent=0 // pred_region
    %s25 = sld [smem:[#allocation3]]
    %p26 = scmp.lt.s32.totalorder %s25, 15
    %s27 = scalar_select %p26, %s25, 15
    %s28 = scalar_lea.vmem %s1, %s27
    %s29 = sld [smem:[#allocation3]]
  $region5: #{bahdanau_decoder_forward.2} parent=0 // pred_fallthru
    _
  // Predicated region
  $region6: #{bahdanau_decoder_forward.2} parent=0 // pred_check
    _
  $region7: #{bahdanau_decoder_forward.2} parent=0 // pred_check_branch
    %31 = sbr.rel (0) target = $region9
  $region8: #{bahdanau_decoder_forward.2} parent=0 // pred_region
    _
  $region9: #{bahdanau_decoder_forward.2} parent=0 // pred_fallthru
    _
  // Predicated region
  $region10: #{bahdanau_decoder_forward.2} parent=0 // pred_check
    _
  $region11: #{bahdanau_decoder_forward.2} parent=0 // pred_check_branch
    %33 = sbr.rel (0) target = $region13
  $region12: #{bahdanau_decoder_forward.2} parent=0 // pred_region
    _
  $region13: #{bahdanau_decoder_forward.2} parent=0 // pred_fallthru
    _
  // Predicated region
  $region14: #{bahdanau_decoder_forward.2} parent=0 // pred_check
    _
  $region15: #{bahdanau_decoder_forward.2} parent=0 // pred_check_branch
    %35 = sbr.rel (0) target = $region17
  $region16: #{bahdanau_decoder_forward.2} parent=0 // pred_region
    _
  $region17: #{bahdanau_decoder_forward.2} parent=0 // pred_fallthru
    _
  // Predicated region
  $region18: #{bahdanau_decoder_forward.2} parent=0 // pred_check
    _
  $region19: #{bahdanau_decoder_forward.2} parent=0 // pred_check_branch
    %37 = sbr.rel (0) target = $region21
  $region20: #{bahdanau_decoder_forward.2} parent=0 // pred_region
    _
  $region21: #{bahdanau_decoder_forward.2} parent=0 // pred_fallthru
    _
  // Predicated region
  $region22: #{bahdanau_decoder_forward.2} parent=0 // pred_check
    _
  $region23: #{bahdanau_decoder_forward.2} parent=0 // pred_check_branch
    %39 = sbr.rel (0) target = $region25
  $region24: #{bahdanau_decoder_forward.2} parent=0 // pred_region
    _
  $region25: #{bahdanau_decoder_forward.2} parent=0 // pred_fallthru
    _
  // Predicated region
  $region26: #{bahdanau_decoder_forward.2} parent=0 // pred_check
    _
  $region27: #{bahdanau_decoder_forward.2} parent=0 // pred_check_branch
    %41 = sbr.rel (0) target = $region29
  $region28: #{bahdanau_decoder_forward.2} parent=0 // pred_region
    _
  $region29: #{bahdanau_decoder_forward.2} parent=0 // pred_fallthru
    _
  // Predicated region
  $region30: #{bahdanau_decoder_forward.2} parent=0 // pred_check
    _
  $region31: #{bahdanau_decoder_forward.2} parent=0 // pred_check_branch
    %43 = sbr.rel (0) target = $region33
  $region32: #{bahdanau_decoder_forward.2} parent=0 // pred_region
    _
  $region33: #{bahdanau_decoder_forward.2} parent=0 // pred_fallthru
    _
  // Predicated region
  $region34: #{bahdanau_decoder_forward.2} parent=0 // pred_check
    _
  $region35: #{bahdanau_decoder_forward.2} parent=0 // pred_check_branch
    %45 = sbr.rel (0) target = $region37
  $region36: #{bahdanau_decoder_forward.2} parent=0 // pred_region
    _
  $region37: #{bahdanau_decoder_forward.2} parent=0 // pred_fallthru
    _
  // Predicated region
  $region38: #{bahdanau_decoder_forward.2} parent=0 // pred_check
    _
  $region39: #{bahdanau_decoder_forward.2} parent=0 // pred_check_branch
    %47 = sbr.rel (0) target = $region41
  $region40: #{bahdanau_decoder_forward.2} parent=0 // pred_region
    _
  $region41: #{bahdanau_decoder_forward.2} parent=0 // pred_fallthru
    _
  // Predicated region
  $region42: #{bahdanau_decoder_forward.2} parent=0 // pred_check
    _
  $region43: #{bahdanau_decoder_forward.2} parent=0 // pred_check_branch
    %49 = sbr.rel (0) target = $region45
  $region44: #{bahdanau_decoder_forward.2} parent=0 // pred_region
    _
  $region45: #{bahdanau_decoder_forward.2} parent=0 // pred_fallthru
    _
  %s50 = sld [smem:[#allocation3]]
  %p51 = scmp.lt.s32.totalorder %s50, 15
  %s52 = scalar_select %p51, %s50, 15
  %s53 = scalar_lea.vmem %s1, %s52
  %s54 = sld [smem:[#allocation3]]
  %p55 = scmp.lt.s32.totalorder %s54, 15
  %s56 = scalar_select %p55, %s54, 15
  %s57 = scalar_lea.vmem %s1, %s56
  %s58 = sld [smem:[#allocation3]]
  %v60 = vld [vmem:[%s2] sm:$0x1]
  %v61 = vld [vmem:[%s57] sm:$0x1]
  %v62 = vld [vmem:[%s5] sm:$0x1]
  %v63 = vld [vmem:[%s4] sm:$0xf]
  %v64 = vld [vmem:[%s4 + $0x4] sm:$0xf]
  %v65 = vld [vmem:[%s4 + $0x8] sm:$0xf]
  %v66 = vld [vmem:[%s4 + $0xc] sm:$0xf]
  %v67 = vld [vmem:[%s4 + $0x10] sm:$0xf]
  %v68 = vld [vmem:[%s4 + $0x14] sm:$0xf]
  %v69 = vld [vmem:[%s4 + $0x18] sm:$0xf]
  %v70 = vld [vmem:[%s4 + $0x1c] sm:$0xf]
  %v71 = vld [vmem:[%s4 + $0x20] sm:$0xf]
  %v72 = vld [vmem:[%s4 + $0x24] sm:$0xf]
  %v73 = vld [vmem:[%s4 + $0x28] sm:$0xf]
  %v74 = vld [vmem:[%s4 + $0x2c] sm:$0xf]
  %v75 = vld [vmem:[%s4 + $0x30] sm:$0xf]
  %v76 = vld [vmem:[%s4 + $0x34] sm:$0xf]
  %v77 = vld [vmem:[%s4 + $0x38] sm:$0xf]
  %v78 = vld [vmem:[%s4 + $0x3c] sm:$0xf]
  %v79 = vld [vmem:[%s6] sm:$0x1]
  %v80 = vmul.f32 %v60, %v79
  %vm81 = vcmask 1040384
  %v82 = vsel %vm81, %v80, 0.0
  %83 = vadd.xlane.f32.xlu0 %v82
  %v84 = vpop.xlane.xlu0 %83
  %v101 = vunpack.c.l.b16 %v63
  %v102 = vunpack.c.l.b16 %v64
  %v103 = vunpack.c.l.b16 %v65
  %v104 = vunpack.c.l.b16 %v66
  %v105 = vunpack.c.l.b16 %v67
  %v106 = vunpack.c.l.b16 %v68
  %v107 = vunpack.c.l.b16 %v69
  %v108 = vunpack.c.l.b16 %v70
  %v109 = vunpack.c.l.b16 %v71
  %v110 = vunpack.c.l.b16 %v72
  %v111 = vunpack.c.l.b16 %v73
  %v112 = vunpack.c.l.b16 %v74
  %v113 = vunpack.c.l.b16 %v75
  %v114 = vunpack.c.l.b16 %v76
  %v115 = vunpack.c.l.b16 %v77
  %v116 = vunpack.c.l.b16 %v78
  %v117 = vpack.c.b16 %v102, %v101
  %v118 = vpack.c.b16 %v104, %v103
  %v119 = vpack.c.b16 %v106, %v105
  %v120 = vpack.c.b16 %v108, %v107
  %v121 = vpack.c.b16 %v110, %v109
  %v122 = vpack.c.b16 %v112, %v111
  %v123 = vpack.c.b16 %v114, %v113
  %v124 = vpack.c.b16 %v116, %v115
  %133 = vmatprep.subr.bf16.mxu0 0
  %134 = vmatpush1.bf16.msra.mxu0 %v117
  %135 = vmatprep.subr.bf16.mxu0 0
  %136 = vmatpush1.bf16.msra.mxu0 %v118
  %137 = vmatprep.subr.bf16.mxu0 0
  %138 = vmatpush1.bf16.msra.mxu0 %v119
  %139 = vmatprep.subr.bf16.mxu0 0
  %140 = vmatpush1.bf16.msra.mxu0 %v120
  %141 = vmatprep.subr.bf16.mxu0 0
  %142 = vmatpush1.bf16.msra.mxu0 %v121
  %143 = vmatprep.subr.bf16.mxu0 0
  %144 = vmatpush1.bf16.msra.mxu0 %v122
  %145 = vmatprep.subr.bf16.mxu0 0
  %146 = vmatpush1.bf16.msra.mxu0 %v123
  %147 = vmatprep.subr.bf16.mxu0 0
  %148 = vmatpush1.bf16.msra.mxu0 %v124
  %149 = vmatprep.subr.bf16.mxu0 0
  %150 = vmatpush1.bf16.msra.mxu0 0
  %151 = vmatprep.subr.bf16.mxu0 0
  %152 = vmatpush1.bf16.msra.mxu0 0
  %153 = vmatprep.subr.bf16.mxu0 0
  %154 = vmatpush1.bf16.msra.mxu0 0
  %155 = vmatprep.subr.bf16.mxu0 0
  %156 = vmatpush1.bf16.msra.mxu0 0
  %157 = vmatprep.subr.bf16.mxu0 0
  %158 = vmatpush1.bf16.msra.mxu0 0
  %159 = vmatprep.subr.bf16.mxu0 0
  %160 = vmatpush1.bf16.msra.mxu0 0
  %161 = vmatprep.subr.bf16.mxu0 0
  %162 = vmatpush1.bf16.msra.mxu0 0
  %163 = vmatprep.subr.bf16.mxu0 0
  %164 = vmatpush1.bf16.msra.mxu0 0
  %165 = vmatprep.mubr.bf16.mxu0 0
  %166 = vmatmul.mubr.bf16.gmra.mrb[0].mxu0 %v62
  %v167 = vpop.f32.mrb[0].mxu0
  %v168 = vadd.f32 %v84, %v167
  %v169 = vpop.f32.mrb[0].mxu0
  %v170 = vpop.f32.mrb[0].mxu0
  %v171 = vpop.f32.mrb[0].mxu0
  %172 = vdwg.mxu0
  %v173 = vld [vmem:[#allocation4] sm:$0x1]
  %175 = vset.pattern.permute.xlu0 0
  %176 = vperm.xlu0 %175, %v173
  %v177 = vpop.permute.xlu0 %176
  %v179 = vlaneseq
  %v180 = vshrl.u32 %v179, 7
  %v181 = vsub.s32 0, %v180
  %v182 = vrot.slane %v177, %v181
  %v183 = vadd.f32 %v168, %v182
  %v184 = vlaneseq
  %v185 = vand.u32 %v184, 127
  %vm186 = vcmp.lt.s32.totalorder %v185, 8
  %v187 = vsel %vm186, %v183, -1e+30
  %vm188 = vcmask 122880
  %v189 = vsel %vm188, %v187, -inf
  %190 = vmax.xlane.f32.xlu0 %v189
  %v191 = vpop.xlane.xlu0 %190
  %v192 = vsub.f32 %v187, %v191
  %v193 = vmul.f32 %v192, 1.442695
  %v194 = vpow.pop %v193
  %v195 = vsel %vm188, %v194, 0.0
  %196 = vadd.xlane.f32.xlu0 %v195
  %v197 = vpop.xlane.xlu0 %196
  %v198 = vrcp.pop %v197
  %v199 = vmul.f32 %v194, %v198
  %200 = vst.msk [vmem:[%s13] sm:$0x1] %vm188, %v199
  %v201 = vpack.c.bf16 %v199, %v199
  %v202 = vld [vmem:[%s3] sm:$0xf]
  %v203 = vld [vmem:[%s3 + $0x4] sm:$0xf]
  %v206 = vunpack.c.l.b16 %v202
  %v207 = vunpack.c.l.b16 %v203
  %v208 = vpack.c.b16 %v207, %v206
  %vm210 = vcmask 130048
  %v212 = vsel %vm210, %v201, 0
  %214 = vmatprep.subr.bf16.mxu0 0
  %215 = vmatpush1.bf16.msra.mxu0 %v208
  %216 = vmatprep.subr.bf16.mxu0 0
  %217 = vmatpush1.bf16.msra.mxu0 0
  %218 = vmatprep.subr.bf16.mxu0 0
  %219 = vmatpush1.bf16.msra.mxu0 0
  %220 = vmatprep.subr.bf16.mxu0 0
  %221 = vmatpush1.bf16.msra.mxu0 0
  %222 = vmatprep.subr.bf16.mxu0 0
  %223 = vmatpush1.bf16.msra.mxu0 0
  %224 = vmatprep.subr.bf16.mxu0 0
  %225 = vmatpush1.bf16.msra.mxu0 0
  %226 = vmatprep.subr.bf16.mxu0 0
  %227 = vmatpush1.bf16.msra.mxu0 0
  %228 = vmatprep.subr.bf16.mxu0 0
  %229 = vmatpush1.bf16.msra.mxu0 0
  %230 = vmatprep.subr.bf16.mxu0 0
  %231 = vmatpush1.bf16.msra.mxu0 0
  %232 = vmatprep.subr.bf16.mxu0 0
  %233 = vmatpush1.bf16.msra.mxu0 0
  %234 = vmatprep.subr.bf16.mxu0 0
  %235 = vmatpush1.bf16.msra.mxu0 0
  %236 = vmatprep.subr.bf16.mxu0 0
  %237 = vmatpush1.bf16.msra.mxu0 0
  %238 = vmatprep.subr.bf16.mxu0 0
  %239 = vmatpush1.bf16.msra.mxu0 0
  %240 = vmatprep.subr.bf16.mxu0 0
  %241 = vmatpush1.bf16.msra.mxu0 0
  %242 = vmatprep.subr.bf16.mxu0 0
  %243 = vmatpush1.bf16.msra.mxu0 0
  %244 = vmatprep.subr.bf16.mxu0 0
  %245 = vmatpush1.bf16.msra.mxu0 0
  %246 = vmatprep.mubr.bf16.mxu0 0
  %247 = vmatmul.mubr.bf16.gmra.mrb[0].mxu0 %v212
  %v248 = vpop.f32.mrb[0].mxu0
  %v249 = vadd.f32 0.0, %v248
  %v250 = vpop.f32.mrb[0].mxu0
  %v251 = vpop.f32.mrb[0].mxu0
  %v252 = vpop.f32.mrb[0].mxu0
  %253 = vdwg.mxu0
  %v254 = vpack.c.bf16 %v61, %v61
  %v255 = vpack.c.bf16 %v249, %v249
  %v256 = vld [vmem:[%s8] sm:$0xff]
  %v257 = vld [vmem:[%s8 + $0x8] sm:$0xf]
  %v258 = vld [vmem:[%s8 + $0xc] sm:$0xff]
  %v259 = vld [vmem:[%s8 + $0x14] sm:$0xf]
  %v260 = vld [vmem:[%s8 + $0x18] sm:$0xff]
  %v261 = vld [vmem:[%s8 + $0x20] sm:$0xf]
  %v262 = vld [vmem:[%s8 + $0x24] sm:$0xff]
  %v263 = vld [vmem:[%s8 + $0x2c] sm:$0xf]
  %v264 = vld [vmem:[%s8 + $0x30] sm:$0xff]
  %v265 = vld [vmem:[%s8 + $0x38] sm:$0xf]
  %v266 = vld [vmem:[%s8 + $0x3c] sm:$0xff]
  %v267 = vld [vmem:[%s8 + $0x44] sm:$0xf]
  %v268 = vld [vmem:[%s8 + $0x48] sm:$0xff]
  %v269 = vld [vmem:[%s8 + $0x50] sm:$0xf]
  %v270 = vld [vmem:[%s8 + $0x54] sm:$0xff]
  %v271 = vld [vmem:[%s8 + $0x5c] sm:$0xf]
  %v272 = vld [vmem:[%s8 + $0x60] sm:$0xff]
  %v273 = vld [vmem:[%s8 + $0x68] sm:$0xf]
  %v274 = vld [vmem:[%s8 + $0x6c] sm:$0xff]
  %v275 = vld [vmem:[%s8 + $0x74] sm:$0xf]
  %v276 = vld [vmem:[%s8 + $0x78] sm:$0xff]
  %v277 = vld [vmem:[%s8 + $0x80] sm:$0xf]
  %v278 = vld [vmem:[%s8 + $0x84] sm:$0xff]
  %v279 = vld [vmem:[%s8 + $0x8c] sm:$0xf]
  %v280 = vld [vmem:[%s8 + $0x90] sm:$0xff]
  %v281 = vld [vmem:[%s8 + $0x98] sm:$0xf]
  %v282 = vld [vmem:[%s8 + $0x9c] sm:$0xff]
  %v283 = vld [vmem:[%s8 + $0xa4] sm:$0xf]
  %v284 = vld [vmem:[%s8 + $0xa8] sm:$0xff]
  %v285 = vld [vmem:[%s8 + $0xb0] sm:$0xf]
  %v286 = vld [vmem:[%s8 + $0xb4] sm:$0xff]
  %v287 = vld [vmem:[%s8 + $0xbc] sm:$0xf]
  %v288 = vld [vmem:[%s8 + $0xc0] sm:$0xff]
  %v289 = vld [vmem:[%s8 + $0xc8] sm:$0xf]
  %v290 = vld [vmem:[%s8 + $0xcc] sm:$0xff]
  %v291 = vld [vmem:[%s8 + $0xd4] sm:$0xf]
  %v292 = vld [vmem:[%s8 + $0xd8] sm:$0xff]
  %v293 = vld [vmem:[%s8 + $0xe0] sm:$0xf]
  %v294 = vld [vmem:[%s8 + $0xe4] sm:$0xff]
  %v295 = vld [vmem:[%s8 + $0xec] sm:$0xf]
  %v296 = vld [vmem:[%s8 + $0xf0] sm:$0xff]
  %v297 = vld [vmem:[%s8 + $0xf8] sm:$0xf]
  %v298 = vld [vmem:[%s8 + $0xfc] sm:$0xff]
  %v299 = vld [vmem:[%s8 + $0x104] sm:$0xf]
  %v300 = vld [vmem:[%s8 + $0x108] sm:$0xff]
  %v301 = vld [vmem:[%s8 + $0x110] sm:$0xf]
  %v302 = vld [vmem:[%s8 + $0x114] sm:$0xff]
  %v303 = vld [vmem:[%s8 + $0x11c] sm:$0xf]
  %v304 = vld [vmem:[%s8 + $0x120] sm:$0xff]
  %v305 = vld [vmem:[%s8 + $0x128] sm:$0xf]
  %v306 = vld [vmem:[%s8 + $0x12c] sm:$0xff]
  %v307 = vld [vmem:[%s8 + $0x134] sm:$0xf]
  %v308 = vld [vmem:[%s8 + $0x138] sm:$0xff]
  %v309 = vld [vmem:[%s8 + $0x140] sm:$0xf]
  %v310 = vld [vmem:[%s8 + $0x144] sm:$0xff]
  %v311 = vld [vmem:[%s8 + $0x14c] sm:$0xf]
  %v312 = vld [vmem:[%s8 + $0x150] sm:$0xff]
  %v313 = vld [vmem:[%s8 + $0x158] sm:$0xf]
  %v314 = vld [vmem:[%s8 + $0x15c] sm:$0xff]
  %v315 = vld [vmem:[%s8 + $0x164] sm:$0xf]
  %v316 = vld [vmem:[%s8 + $0x168] sm:$0xff]
  %v317 = vld [vmem:[%s8 + $0x170] sm:$0xf]
  %v318 = vld [vmem:[%s8 + $0x174] sm:$0xff]
  %v319 = vld [vmem:[%s8 + $0x17c] sm:$0xf]
  %v320 = vld [vmem:[%s9] sm:$0x7]
  %v385 = vunpack.c.l.b16 %v256
  %v386 = vunpack.c.h.b16 %v256
  %v387 = vunpack.c.l.b16 %v257
  %v388 = vunpack.c.l.b16 %v258
  %v389 = vunpack.c.h.b16 %v258
  %v390 = vunpack.c.l.b16 %v259
  %v391 = vunpack.c.l.b16 %v260
  %v392 = vunpack.c.h.b16 %v260
  %v393 = vunpack.c.l.b16 %v261
  %v394 = vunpack.c.l.b16 %v262
  %v395 = vunpack.c.h.b16 %v262
  %v396 = vunpack.c.l.b16 %v263
  %v397 = vunpack.c.l.b16 %v264
  %v398 = vunpack.c.h.b16 %v264
  %v399 = vunpack.c.l.b16 %v265
  %v400 = vunpack.c.l.b16 %v266
  %v401 = vunpack.c.h.b16 %v266
  %v402 = vunpack.c.l.b16 %v267
  %v403 = vunpack.c.l.b16 %v268
  %v404 = vunpack.c.h.b16 %v268
  %v405 = vunpack.c.l.b16 %v269
  %v406 = vunpack.c.l.b16 %v270
  %v407 = vunpack.c.h.b16 %v270
  %v408 = vunpack.c.l.b16 %v271
  %v409 = vunpack.c.l.b16 %v272
  %v410 = vunpack.c.h.b16 %v272
  %v411 = vunpack.c.l.b16 %v273
  %v412 = vunpack.c.l.b16 %v274
  %v413 = vunpack.c.h.b16 %v274
  %v414 = vunpack.c.l.b16 %v275
  %v415 = vunpack.c.l.b16 %v276
  %v416 = vunpack.c.h.b16 %v276
  %v417 = vunpack.c.l.b16 %v277
  %v418 = vunpack.c.l.b16 %v278
  %v419 = vunpack.c.h.b16 %v278
  %v420 = vunpack.c.l.b16 %v279
  %v421 = vunpack.c.l.b16 %v280
  %v422 = vunpack.c.h.b16 %v280
  %v423 = vunpack.c.l.b16 %v281
  %v424 = vunpack.c.l.b16 %v282
  %v425 = vunpack.c.h.b16 %v282
  %v426 = vunpack.c.l.b16 %v283
  %v427 = vunpack.c.l.b16 %v284
  %v428 = vunpack.c.h.b16 %v284
  %v429 = vunpack.c.l.b16 %v285
  %v430 = vunpack.c.l.b16 %v286
  %v431 = vunpack.c.h.b16 %v286
  %v432 = vunpack.c.l.b16 %v287
  %v433 = vunpack.c.l.b16 %v288
  %v434 = vunpack.c.h.b16 %v288
  %v435 = vunpack.c.l.b16 %v289
  %v436 = vunpack.c.l.b16 %v290
  %v437 = vunpack.c.h.b16 %v290
  %v438 = vunpack.c.l.b16 %v291
  %v439 = vunpack.c.l.b16 %v292
  %v440 = vunpack.c.h.b16 %v292
  %v441 = vunpack.c.l.b16 %v293
  %v442 = vunpack.c.l.b16 %v294
  %v443 = vunpack.c.h.b16 %v294
  %v444 = vunpack.c.l.b16 %v295
  %v445 = vunpack.c.l.b16 %v296
  %v446 = vunpack.c.h.b16 %v296
  %v447 = vunpack.c.l.b16 %v297
  %v448 = vunpack.c.l.b16 %v298
  %v449 = vunpack.c.h.b16 %v298
  %v450 = vunpack.c.l.b16 %v299
  %v451 = vunpack.c.l.b16 %v300
  %v452 = vunpack.c.h.b16 %v300
  %v453 = vunpack.c.l.b16 %v301
  %v454 = vunpack.c.l.b16 %v302
  %v455 = vunpack.c.h.b16 %v302
  %v456 = vunpack.c.l.b16 %v303
  %v457 = vunpack.c.l.b16 %v304
  %v458 = vunpack.c.h.b16 %v304
  %v459 = vunpack.c.l.b16 %v305
  %v460 = vunpack.c.l.b16 %v306
  %v461 = vunpack.c.h.b16 %v306
  %v462 = vunpack.c.l.b16 %v307
  %v463 = vunpack.c.l.b16 %v308
  %v464 = vunpack.c.h.b16 %v308
  %v465 = vunpack.c.l.b16 %v309
  %v466 = vunpack.c.l.b16 %v310
  %v467 = vunpack.c.h.b16 %v310
  %v468 = vunpack.c.l.b16 %v311
  %v469 = vunpack.c.l.b16 %v312
  %v470 = vunpack.c.h.b16 %v312
  %v471 = vunpack.c.l.b16 %v313
  %v472 = vunpack.c.l.b16 %v314
  %v473 = vunpack.c.h.b16 %v314
  %v474 = vunpack.c.l.b16 %v315
  %v475 = vunpack.c.l.b16 %v316
  %v476 = vunpack.c.h.b16 %v316
  %v477 = vunpack.c.l.b16 %v317
  %v478 = vunpack.c.l.b16 %v318
  %v479 = vunpack.c.h.b16 %v318
  %v480 = vunpack.c.l.b16 %v319
  %v481 = vpack.c.b16 %v388, %v385
  %v482 = vpack.c.b16 %v389, %v386
  %v483 = vpack.c.b16 %v390, %v387
  %v484 = vpack.c.b16 %v394, %v391
  %v485 = vpack.c.b16 %v395, %v392
  %v486 = vpack.c.b16 %v396, %v393
  %v487 = vpack.c.b16 %v400, %v397
  %v488 = vpack.c.b16 %v401, %v398
  %v489 = vpack.c.b16 %v402, %v399
  %v490 = vpack.c.b16 %v406, %v403
  %v491 = vpack.c.b16 %v407, %v404
  %v492 = vpack.c.b16 %v408, %v405
  %v493 = vpack.c.b16 %v412, %v409
  %v494 = vpack.c.b16 %v413, %v410
  %v495 = vpack.c.b16 %v414, %v411
  %v496 = vpack.c.b16 %v418, %v415
  %v497 = vpack.c.b16 %v419, %v416
  %v498 = vpack.c.b16 %v420, %v417
  %v499 = vpack.c.b16 %v424, %v421
  %v500 = vpack.c.b16 %v425, %v422
  %v501 = vpack.c.b16 %v426, %v423
  %v502 = vpack.c.b16 %v430, %v427
  %v503 = vpack.c.b16 %v431, %v428
  %v504 = vpack.c.b16 %v432, %v429
  %v505 = vpack.c.b16 %v436, %v433
  %v506 = vpack.c.b16 %v437, %v434
  %v507 = vpack.c.b16 %v438, %v435
  %v508 = vpack.c.b16 %v442, %v439
  %v509 = vpack.c.b16 %v443, %v440
  %v510 = vpack.c.b16 %v444, %v441
  %v511 = vpack.c.b16 %v448, %v445
  %v512 = vpack.c.b16 %v449, %v446
  %v513 = vpack.c.b16 %v450, %v447
  %v514 = vpack.c.b16 %v454, %v451
  %v515 = vpack.c.b16 %v455, %v452
  %v516 = vpack.c.b16 %v456, %v453
  %v517 = vpack.c.b16 %v460, %v457
  %v518 = vpack.c.b16 %v461, %v458
  %v519 = vpack.c.b16 %v462, %v459
  %v520 = vpack.c.b16 %v466, %v463
  %v521 = vpack.c.b16 %v467, %v464
  %v522 = vpack.c.b16 %v468, %v465
  %v523 = vpack.c.b16 %v472, %v469
  %v524 = vpack.c.b16 %v473, %v470
  %v525 = vpack.c.b16 %v474, %v471
  %v526 = vpack.c.b16 %v478, %v475
  %v527 = vpack.c.b16 %v479, %v476
  %v528 = vpack.c.b16 %v480, %v477
  %v578 = vlaneseq
  %v579 = vshrl.u32 %v578, 7
  %v580 = vsub.s32 0, %v579
  %v581 = vrot.slane %v320, %v580
  %v582 = vlaneseq
  %v583 = vshrl.u32 %v582, 7
  %v584 = vsub.s32 1, %v583
  %v585 = vrot.slane %v320, %v584
  %v586 = vlaneseq
  %v587 = vshrl.u32 %v586, 7
  %v588 = vsub.s32 2, %v587
  %v589 = vrot.slane %v320, %v588
  %593 = vmatprep.subr.bf16.mxu0 %v482
  %594 = vmatpush1.bf16.msra.mxu0 %v481
  %595 = vmatprep.subr.bf16.mxu0 %v485
  %596 = vmatpush1.bf16.msra.mxu0 %v484
  %597 = vmatprep.subr.bf16.mxu0 %v488
  %598 = vmatpush1.bf16.msra.mxu0 %v487
  %599 = vmatprep.subr.bf16.mxu0 %v491
  %600 = vmatpush1.bf16.msra.mxu0 %v490
  %601 = vmatprep.subr.bf16.mxu0 %v494
  %602 = vmatpush1.bf16.msra.mxu0 %v493
  %603 = vmatprep.subr.bf16.mxu0 %v497
  %604 = vmatpush1.bf16.msra.mxu0 %v496
  %605 = vmatprep.subr.bf16.mxu0 %v500
  %606 = vmatpush1.bf16.msra.mxu0 %v499
  %607 = vmatprep.subr.bf16.mxu0 %v503
  %608 = vmatpush1.bf16.msra.mxu0 %v502
  %609 = vmatprep.subr.bf16.mxu0 %v506
  %610 = vmatpush1.bf16.msra.mxu0 %v505
  %611 = vmatprep.subr.bf16.mxu0 %v509
  %612 = vmatpush1.bf16.msra.mxu0 %v508
  %613 = vmatprep.subr.bf16.mxu0 %v512
  %614 = vmatpush1.bf16.msra.mxu0 %v511
  %615 = vmatprep.subr.bf16.mxu0 %v515
  %616 = vmatpush1.bf16.msra.mxu0 %v514
  %617 = vmatprep.subr.bf16.mxu0 %v518
  %618 = vmatpush1.bf16.msra.mxu0 %v517
  %619 = vmatprep.subr.bf16.mxu0 %v521
  %620 = vmatpush1.bf16.msra.mxu0 %v520
  %621 = vmatprep.subr.bf16.mxu0 %v524
  %622 = vmatpush1.bf16.msra.mxu0 %v523
  %623 = vmatprep.subr.bf16.mxu0 %v527
  %624 = vmatpush1.bf16.msra.mxu0 %v526
  %625 = vmatprep.mubr.bf16.mxu0 %v255
  %626 = vmatmul.mubr.bf16.gmra.mrb[0].mxu0 %v254
  %v627 = vpop.f32.mrb[0].mxu0
  %v628 = vadd.f32 %v581, %v627
  %v629 = vpop.f32.mrb[0].mxu0
  %v630 = vadd.f32 %v585, %v629
  %v631 = vpop.f32.mrb[0].mxu0
  %v632 = vpop.f32.mrb[0].mxu0
  %633 = vdwg.mxu0
  %634 = vmatprep.subr.bf16.mxu0 0
  %635 = vmatpush1.bf16.msra.mxu0 %v483
  %636 = vmatprep.subr.bf16.mxu0 0
  %637 = vmatpush1.bf16.msra.mxu0 %v486
  %638 = vmatprep.subr.bf16.mxu0 0
  %639 = vmatpush1.bf16.msra.mxu0 %v489
  %640 = vmatprep.subr.bf16.mxu0 0
  %641 = vmatpush1.bf16.msra.mxu0 %v492
  %642 = vmatprep.subr.bf16.mxu0 0
  %643 = vmatpush1.bf16.msra.mxu0 %v495
  %644 = vmatprep.subr.bf16.mxu0 0
  %645 = vmatpush1.bf16.msra.mxu0 %v498
  %646 = vmatprep.subr.bf16.mxu0 0
  %647 = vmatpush1.bf16.msra.mxu0 %v501
  %648 = vmatprep.subr.bf16.mxu0 0
  %649 = vmatpush1.bf16.msra.mxu0 %v504
  %650 = vmatprep.subr.bf16.mxu0 0
  %651 = vmatpush1.bf16.msra.mxu0 %v507
  %652 = vmatprep.subr.bf16.mxu0 0
  %653 = vmatpush1.bf16.msra.mxu0 %v510
  %654 = vmatprep.subr.bf16.mxu0 0
  %655 = vmatpush1.bf16.msra.mxu0 %v513
  %656 = vmatprep.subr.bf16.mxu0 0
  %657 = vmatpush1.bf16.msra.mxu0 %v516
  %658 = vmatprep.subr.bf16.mxu0 0
  %659 = vmatpush1.bf16.msra.mxu0 %v519
  %660 = vmatprep.subr.bf16.mxu0 0
  %661 = vmatpush1.bf16.msra.mxu0 %v522
  %662 = vmatprep.subr.bf16.mxu0 0
  %663 = vmatpush1.bf16.msra.mxu0 %v525
  %664 = vmatprep.subr.bf16.mxu0 0
  %665 = vmatpush1.bf16.msra.mxu0 %v528
  %666 = vmatprep.mubr.bf16.mxu0 %v255
  %667 = vmatmul.mubr.bf16.gmra.mrb[0].mxu0 %v254
  %v668 = vpop.f32.mrb[0].mxu0
  %v669 = vadd.f32 %v589, %v668
  %v670 = vpop.f32.mrb[0].mxu0
  %v671 = vpop.f32.mrb[0].mxu0
  %v672 = vpop.f32.mrb[0].mxu0
  %673 = vdwg.mxu0
  %v674 = vpack.c.bf16 %v60, %v60
  %v675 = vld [vmem:[%s10] sm:$0xff]
  %v676 = vld [vmem:[%s10 + $0x8] sm:$0xf]
  %v677 = vld [vmem:[%s10 + $0xc] sm:$0xff]
  %v678 = vld [vmem:[%s10 + $0x14] sm:$0xf]
  %v679 = vld [vmem:[%s10 + $0x18] sm:$0xff]
  %v680 = vld [vmem:[%s10 + $0x20] sm:$0xf]
  %v681 = vld [vmem:[%s10 + $0x24] sm:$0xff]
  %v682 = vld [vmem:[%s10 + $0x2c] sm:$0xf]
  %v683 = vld [vmem:[%s10 + $0x30] sm:$0xff]
  %v684 = vld [vmem:[%s10 + $0x38] sm:$0xf]
  %v685 = vld [vmem:[%s10 + $0x3c] sm:$0xff]
  %v686 = vld [vmem:[%s10 + $0x44] sm:$0xf]
  %v687 = vld [vmem:[%s10 + $0x48] sm:$0xff]
  %v688 = vld [vmem:[%s10 + $0x50] sm:$0xf]
  %v689 = vld [vmem:[%s10 + $0x54] sm:$0xff]
  %v690 = vld [vmem:[%s10 + $0x5c] sm:$0xf]
  %v691 = vld [vmem:[%s10 + $0x60] sm:$0xff]
  %v692 = vld [vmem:[%s10 + $0x68] sm:$0xf]
  %v693 = vld [vmem:[%s10 + $0x6c] sm:$0xff]
  %v694 = vld [vmem:[%s10 + $0x74] sm:$0xf]
  %v695 = vld [vmem:[%s10 + $0x78] sm:$0xff]
  %v696 = vld [vmem:[%s10 + $0x80] sm:$0xf]
  %v697 = vld [vmem:[%s10 + $0x84] sm:$0xff]
  %v698 = vld [vmem:[%s10 + $0x8c] sm:$0xf]
  %v699 = vld [vmem:[%s10 + $0x90] sm:$0xff]
  %v700 = vld [vmem:[%s10 + $0x98] sm:$0xf]
  %v701 = vld [vmem:[%s10 + $0x9c] sm:$0xff]
  %v702 = vld [vmem:[%s10 + $0xa4] sm:$0xf]
  %v703 = vld [vmem:[%s10 + $0xa8] sm:$0xff]
  %v704 = vld [vmem:[%s10 + $0xb0] sm:$0xf]
  %v705 = vld [vmem:[%s10 + $0xb4] sm:$0xff]
  %v706 = vld [vmem:[%s10 + $0xbc] sm:$0xf]
  %v707 = vld [vmem:[%s11] sm:$0x7]
  %v740 = vunpack.c.l.b16 %v675
  %v741 = vunpack.c.h.b16 %v675
  %v742 = vunpack.c.l.b16 %v676
  %v743 = vunpack.c.l.b16 %v677
  %v744 = vunpack.c.h.b16 %v677
  %v745 = vunpack.c.l.b16 %v678
  %v746 = vunpack.c.l.b16 %v679
  %v747 = vunpack.c.h.b16 %v679
  %v748 = vunpack.c.l.b16 %v680
  %v749 = vunpack.c.l.b16 %v681
  %v750 = vunpack.c.h.b16 %v681
  %v751 = vunpack.c.l.b16 %v682
  %v752 = vunpack.c.l.b16 %v683
  %v753 = vunpack.c.h.b16 %v683
  %v754 = vunpack.c.l.b16 %v684
  %v755 = vunpack.c.l.b16 %v685
  %v756 = vunpack.c.h.b16 %v685
  %v757 = vunpack.c.l.b16 %v686
  %v758 = vunpack.c.l.b16 %v687
  %v759 = vunpack.c.h.b16 %v687
  %v760 = vunpack.c.l.b16 %v688
  %v761 = vunpack.c.l.b16 %v689
  %v762 = vunpack.c.h.b16 %v689
  %v763 = vunpack.c.l.b16 %v690
  %v764 = vunpack.c.l.b16 %v691
  %v765 = vunpack.c.h.b16 %v691
  %v766 = vunpack.c.l.b16 %v692
  %v767 = vunpack.c.l.b16 %v693
  %v768 = vunpack.c.h.b16 %v693
  %v769 = vunpack.c.l.b16 %v694
  %v770 = vunpack.c.l.b16 %v695
  %v771 = vunpack.c.h.b16 %v695
  %v772 = vunpack.c.l.b16 %v696
  %v773 = vunpack.c.l.b16 %v697
  %v774 = vunpack.c.h.b16 %v697
  %v775 = vunpack.c.l.b16 %v698
  %v776 = vunpack.c.l.b16 %v699
  %v777 = vunpack.c.h.b16 %v699
  %v778 = vunpack.c.l.b16 %v700
  %v779 = vunpack.c.l.b16 %v701
  %v780 = vunpack.c.h.b16 %v701
  %v781 = vunpack.c.l.b16 %v702
  %v782 = vunpack.c.l.b16 %v703
  %v783 = vunpack.c.h.b16 %v703
  %v784 = vunpack.c.l.b16 %v704
  %v785 = vunpack.c.l.b16 %v705
  %v786 = vunpack.c.h.b16 %v705
  %v787 = vunpack.c.l.b16 %v706
  %v788 = vpack.c.b16 %v743, %v740
  %v789 = vpack.c.b16 %v744, %v741
  %v790 = vpack.c.b16 %v745, %v742
  %v791 = vpack.c.b16 %v749, %v746
  %v792 = vpack.c.b16 %v750, %v747
  %v793 = vpack.c.b16 %v751, %v748
  %v794 = vpack.c.b16 %v755, %v752
  %v795 = vpack.c.b16 %v756, %v753
  %v796 = vpack.c.b16 %v757, %v754
  %v797 = vpack.c.b16 %v761, %v758
  %v798 = vpack.c.b16 %v762, %v759
  %v799 = vpack.c.b16 %v763, %v760
  %v800 = vpack.c.b16 %v767, %v764
  %v801 = vpack.c.b16 %v768, %v765
  %v802 = vpack.c.b16 %v769, %v766
  %v803 = vpack.c.b16 %v773, %v770
  %v804 = vpack.c.b16 %v774, %v771
  %v805 = vpack.c.b16 %v775, %v772
  %v806 = vpack.c.b16 %v779, %v776
  %v807 = vpack.c.b16 %v780, %v777
  %v808 = vpack.c.b16 %v781, %v778
  %v809 = vpack.c.b16 %v785, %v782
  %v810 = vpack.c.b16 %v786, %v783
  %v811 = vpack.c.b16 %v787, %v784
  %v837 = vlaneseq
  %v838 = vshrl.u32 %v837, 7
  %v839 = vsub.s32 0, %v838
  %v840 = vrot.slane %v707, %v839
  %v841 = vlaneseq
  %v842 = vshrl.u32 %v841, 7
  %v843 = vsub.s32 1, %v842
  %v844 = vrot.slane %v707, %v843
  %v845 = vlaneseq
  %v846 = vshrl.u32 %v845, 7
  %v847 = vsub.s32 2, %v846
  %v848 = vrot.slane %v707, %v847
  %852 = vmatprep.subr.bf16.mxu0 %v789
  %853 = vmatpush1.bf16.msra.mxu0 %v788
  %854 = vmatprep.subr.bf16.mxu0 %v792
  %855 = vmatpush1.bf16.msra.mxu0 %v791
  %856 = vmatprep.subr.bf16.mxu0 %v795
  %857 = vmatpush1.bf16.msra.mxu0 %v794
  %858 = vmatprep.subr.bf16.mxu0 %v798
  %859 = vmatpush1.bf16.msra.mxu0 %v797
  %860 = vmatprep.subr.bf16.mxu0 %v801
  %861 = vmatpush1.bf16.msra.mxu0 %v800
  %862 = vmatprep.subr.bf16.mxu0 %v804
  %863 = vmatpush1.bf16.msra.mxu0 %v803
  %864 = vmatprep.subr.bf16.mxu0 %v807
  %865 = vmatpush1.bf16.msra.mxu0 %v806
  %866 = vmatprep.subr.bf16.mxu0 %v810
  %867 = vmatpush1.bf16.msra.mxu0 %v809
  %868 = vmatprep.subr.bf16.mxu0 0
  %869 = vmatpush1.bf16.msra.mxu0 0
  %870 = vmatprep.subr.bf16.mxu0 0
  %871 = vmatpush1.bf16.msra.mxu0 0
  %872 = vmatprep.subr.bf16.mxu0 0
  %873 = vmatpush1.bf16.msra.mxu0 0
  %874 = vmatprep.subr.bf16.mxu0 0
  %875 = vmatpush1.bf16.msra.mxu0 0
  %876 = vmatprep.subr.bf16.mxu0 0
  %877 = vmatpush1.bf16.msra.mxu0 0
  %878 = vmatprep.subr.bf16.mxu0 0
  %879 = vmatpush1.bf16.msra.mxu0 0
  %880 = vmatprep.subr.bf16.mxu0 0
  %881 = vmatpush1.bf16.msra.mxu0 0
  %882 = vmatprep.subr.bf16.mxu0 0
  %883 = vmatpush1.bf16.msra.mxu0 0
  %884 = vmatprep.mubr.bf16.mxu0 0
  %885 = vmatmul.mubr.bf16.gmra.mrb[0].mxu0 %v674
  %v886 = vpop.f32.mrb[0].mxu0
  %v887 = vadd.f32 %v840, %v886
  %v888 = vpop.f32.mrb[0].mxu0
  %v889 = vadd.f32 %v844, %v888
  %v890 = vpop.f32.mrb[0].mxu0
  %v891 = vpop.f32.mrb[0].mxu0
  %892 = vdwg.mxu0
  %893 = vmatprep.subr.bf16.mxu0 0
  %894 = vmatpush1.bf16.msra.mxu0 %v790
  %895 = vmatprep.subr.bf16.mxu0 0
  %896 = vmatpush1.bf16.msra.mxu0 %v793
  %897 = vmatprep.subr.bf16.mxu0 0
  %898 = vmatpush1.bf16.msra.mxu0 %v796
  %899 = vmatprep.subr.bf16.mxu0 0
  %900 = vmatpush1.bf16.msra.mxu0 %v799
  %901 = vmatprep.subr.bf16.mxu0 0
  %902 = vmatpush1.bf16.msra.mxu0 %v802
  %903 = vmatprep.subr.bf16.mxu0 0
  %904 = vmatpush1.bf16.msra.mxu0 %v805
  %905 = vmatprep.subr.bf16.mxu0 0
  %906 = vmatpush1.bf16.msra.mxu0 %v808
  %907 = vmatprep.subr.bf16.mxu0 0
  %908 = vmatpush1.bf16.msra.mxu0 %v811
  %909 = vmatprep.subr.bf16.mxu0 0
  %910 = vmatpush1.bf16.msra.mxu0 0
  %911 = vmatprep.subr.bf16.mxu0 0
  %912 = vmatpush1.bf16.msra.mxu0 0
  %913 = vmatprep.subr.bf16.mxu0 0
  %914 = vmatpush1.bf16.msra.mxu0 0
  %915 = vmatprep.subr.bf16.mxu0 0
  %916 = vmatpush1.bf16.msra.mxu0 0
  %917 = vmatprep.subr.bf16.mxu0 0
  %918 = vmatpush1.bf16.msra.mxu0 0
  %919 = vmatprep.subr.bf16.mxu0 0
  %920 = vmatpush1.bf16.msra.mxu0 0
  %921 = vmatprep.subr.bf16.mxu0 0
  %922 = vmatpush1.bf16.msra.mxu0 0
  %923 = vmatprep.subr.bf16.mxu0 0
  %924 = vmatpush1.bf16.msra.mxu0 0
  %925 = vmatprep.mubr.bf16.mxu0 0
  %926 = vmatmul.mubr.bf16.gmra.mrb[0].mxu0 %v674
  %v927 = vpop.f32.mrb[0].mxu0
  %v928 = vadd.f32 %v848, %v927
  %v929 = vpop.f32.mrb[0].mxu0
  %v930 = vpop.f32.mrb[0].mxu0
  %v931 = vpop.f32.mrb[0].mxu0
  %932 = vdwg.mxu0
  %v933 = vadd.f32 %v628, %v887
  %v934 = vmul.f32 %v933, 0.5
  %v935 = vtanh.pop %v934
  %v936 = vmul.f32 %v935, 0.5
  %v937 = vadd.f32 %v936, 0.5
  %v938 = vadd.f32 %v630, %v889
  %v939 = vmul.f32 %v938, 0.5
  %v940 = vtanh.pop %v939
  %v941 = vmul.f32 %v940, 0.5
  %v942 = vadd.f32 %v941, 0.5
  %v943 = vmul.f32 %v937, %v928
  %v944 = vadd.f32 %v669, %v943
  %v945 = vtanh.pop %v944
  %v946 = vsub.f32 1.0, %v942
  %v947 = vmul.f32 %v946, %v945
  %v948 = vmul.f32 %v942, %v60
  %v949 = vadd.f32 %v947, %v948
  %950 = vst [vmem:[%s12] sm:$0x1] %v949
  %v951 = vpack.c.bf16 %v949, %v949
  %v954 = vcombine.low %v951, %v255
  %v956 = vunpack.c.l.s4 1966171168
  %v957 = vunpack.c.0.s8 %v956
  %v958 = vlaneseq
  %v959 = vshrl.u32 %v958, 7
  %v960 = vsub.s32 %v957, %v959
  %v961 = vrot.slane %v954, %v960
  %v963 = vunpack.c.l.s4 1966171168
  %v964 = vunpack.c.0.s8 %v963
  %v965 = vlaneseq
  %v966 = vshrl.u32 %v965, 7
  %v967 = vsub.s32 %v964, %v966
  %v968 = vrot.slane %v961, %v967
  %vm970 = vcmask 1040384
  %vm971 = vsmask.f32 256
  %vm972 = vmand %vm970, %vm971
  %vm973 = vcmask 1041409
  %vm974 = vsmask.f32 1280
  %vm975 = vmand %vm973, %vm974
  %vm976 = vmor %vm975, %vm972
  %v977 = vld [vmem:[%s14] sm:$0x3]
  %v978 = vsel %vm976, %v968, %v977
  %979 = vst [vmem:[%s14] sm:$0x3] %v978
  // Predicated region
  $region46: #{bahdanau_decoder_forward.2} parent=0 // pred_check
    _
  $region47: #{bahdanau_decoder_forward.2} parent=0 // pred_check_branch
    %981 = sbr.rel (0) target = $region49
  $region48: #{bahdanau_decoder_forward.2} parent=0 // pred_region
    _
  $region49: #{bahdanau_decoder_forward.2} parent=0 // pred_fallthru
    _
  // Predicated region
  $region50: #{bahdanau_decoder_forward.2} parent=0 // pred_check
    _
  $region51: #{bahdanau_decoder_forward.2} parent=0 // pred_check_branch
    %983 = sbr.rel (0) target = $region53
  $region52: #{bahdanau_decoder_forward.2} parent=0 // pred_region
    _
  $region53: #{bahdanau_decoder_forward.2} parent=0 // pred_fallthru
    _
  // Predicated region
  $region54: #{bahdanau_decoder_forward.2} parent=0 // pred_check
    _
  $region55: #{bahdanau_decoder_forward.2} parent=0 // pred_check_branch
    %985 = sbr.rel (0) target = $region57
  $region56: #{bahdanau_decoder_forward.2} parent=0 // pred_region
    _
  $region57: #{bahdanau_decoder_forward.2} parent=0 // pred_fallthru
    _
  // Predicated region
  $region58: #{bahdanau_decoder_forward.2} parent=0 // pred_check
    _
  $region59: #{bahdanau_decoder_forward.2} parent=0 // pred_check_branch
    %987 = sbr.rel (0) target = $region61
  $region60: #{bahdanau_decoder_forward.2} parent=0 // pred_region
    _
  $region61: #{bahdanau_decoder_forward.2} parent=0 // pred_fallthru
    _
  // Predicated region
  $region62: #{bahdanau_decoder_forward.2} parent=0 // pred_check
    _
  $region63: #{bahdanau_decoder_forward.2} parent=0 // pred_check_branch
    %989 = sbr.rel (0) target = $region65
  $region64: #{bahdanau_decoder_forward.2} parent=0 // pred_region
    _
  $region65: #{bahdanau_decoder_forward.2} parent=0 // pred_fallthru
    _
  // Predicated region
  $region66: #{bahdanau_decoder_forward.2} parent=0 // pred_check
    _
  $region67: #{bahdanau_decoder_forward.2} parent=0 // pred_check_branch
    %991 = sbr.rel (0) target = $region69
  $region68: #{bahdanau_decoder_forward.2} parent=0 // pred_region
    _
  $region69: #{bahdanau_decoder_forward.2} parent=0 // pred_fallthru
    _

</llo_original>
